<compile_context>
chip_gen: v7x
topology: tpu7x:2x2x1
jax: 0.10.0
libtpu: 0.0.40
codegen_flags: <defaults>
</compile_context>

<pallas_src>
import math

import jax
import jax.numpy as jnp
import numpy as np
from jax.experimental import pallas as pl
from jax.experimental.pallas import tpu as pltpu

LEAKY_SLOPE_SCA = 0.01   # torch.nn.LeakyReLU default
LEAKY_SLOPE_VEC = 0.2    # VNLeakyReLU default
VN_EPS = 1e-6


# ----------------------------- kernel helpers ------------------------------ #
def _gdb_linear_fm(s, v, wv1_t, wv2_t, wsv_t, wss_t, T, need_vec=True):
    """GDBLinear, feature-major.  s: (Cs_in, T); v: (Cv_in, 3T) with the three
    spatial components stacked along the lane axis (x | y | z)."""
    vi = jnp.dot(wv1_t, v, preferred_element_type=jnp.float32)             # (H, 3T)
    vx, vy, vz = vi[:, :T], vi[:, T:2 * T], vi[:, 2 * T:]
    vnorm = jnp.sqrt(vx * vx + vy * vy + vz * vz)                          # (H, T)
    out_s = (jnp.dot(wsv_t, vnorm, preferred_element_type=jnp.float32)
             + jnp.dot(wss_t, s, preferred_element_type=jnp.float32))      # (Cs_out, T)
    out_v = (jnp.dot(wv2_t, vi, preferred_element_type=jnp.float32)
             if need_vec else None)                                        # (Cv_out, 3T)
    return out_s, out_v


def _vn_leaky_relu_fm(v, wd_t, T):
    """VNLeakyReLU, feature-major, components stacked along lanes."""
    d = jnp.dot(wd_t, v, preferred_element_type=jnp.float32)               # (C, 3T)
    vx, vy, vz = v[:, :T], v[:, T:2 * T], v[:, 2 * T:]
    dx, dy, dz = d[:, :T], d[:, T:2 * T], d[:, 2 * T:]
    dot = vx * dx + vy * dy + vz * dz                                      # (C, T)
    dnsq = dx * dx + dy * dy + dz * dz
    coef = dot * pl.reciprocal(dnsq + VN_EPS, approx=True)                 # EUP slot
    # s*v + (1-s)*(mask*v + (1-mask)*(v - coef*d))  ==  v - (1-s)*(dot<0)*coef*d
    factor = (1.0 - LEAKY_SLOPE_VEC) * jnp.where(dot < 0, coef, 0.0)       # (C, T)
    factor = jnp.concatenate([factor, factor, factor], axis=-1)            # (C, 3T)
    return v - factor * d


# -------------------------------- the kernel ------------------------------- #
def position_predictor_kernel(
    sca_ref, vec_ref, pos_ref,
    l1_wv1, l1_wv2, l1_wsv, l1_wss, l1_wd,
    l2_wv1, l2_wv2, l2_wsv, l2_wss,
    hd_wv1, mu_wv2, ls_wv2, pi_wsv, pi_wss,
    relmu_ref, absmu_ref, sigma_ref, pi_ref,
):
    T = vec_ref.shape[2]

    s = sca_ref[...]                                                       # (S, T)
    # stack the 3 spatial components along lanes -> one matmul per VNLinear.
    v = jnp.concatenate([vec_ref[0], vec_ref[1], vec_ref[2]], axis=-1)     # (V, 3T)

    # mlp[0]: GDBPerceptronVN = GDBLinear + VNLeakyReLU (vec) + LeakyReLU (sca)
    s, v = _gdb_linear_fm(s, v, l1_wv1[...], l1_wv2[...], l1_wsv[...], l1_wss[...], T)
    v = _vn_leaky_relu_fm(v, l1_wd[...], T)
    s = jnp.where(s >= 0, s, LEAKY_SLOPE_SCA * s)

    # mlp[1]: GDBLinear
    s, v = _gdb_linear_fm(s, v, l2_wv1[...], l2_wv2[...], l2_wsv[...], l2_wss[...], T)

    # heads: mu / logsigma / pi share one fused VNLinear on the common (s, v)
    hi = jnp.dot(hd_wv1[...], v, preferred_element_type=jnp.float32)       # (Hmu+Hls+Hpi, 3T)
    h_mu = mu_wv2.shape[1]
    h_ls = ls_wv2.shape[1]
    mu_i = hi[:h_mu]
    ls_i = hi[h_mu:h_mu + h_ls]
    pi_i = hi[h_mu + h_ls:]

    mu_w = jnp.dot(mu_wv2[...], mu_i, preferred_element_type=jnp.float32)  # (K, 3T)
    sg_w = jnp.exp(jnp.dot(ls_wv2[...], ls_i, preferred_element_type=jnp.float32))

    px, py, pz = pi_i[:, :T], pi_i[:, T:2 * T], pi_i[:, 2 * T:]
    pi_norm = jnp.sqrt(px * px + py * py + pz * pz)                        # (Hpi, T)
    pi_s = (jnp.dot(pi_wsv[...], pi_norm, preferred_element_type=jnp.float32)
            + jnp.dot(pi_wss[...], s, preferred_element_type=jnp.float32)) # (K, T)

    # softmax over the mixture components (K on the sublane axis)
    m = jnp.max(pi_s, axis=0, keepdims=True)
    e = jnp.exp(pi_s - m)
    pi_ref[...] = e / jnp.sum(e, axis=0, keepdims=True)

    for c in range(3):
        sl = slice(c * T, (c + 1) * T)
        mu_c = mu_w[:, sl]
        relmu_ref[c] = mu_c
        absmu_ref[c] = mu_c + pos_ref[c]                                   # (1, T) broadcast
        sigma_ref[c] = sg_w[:, sl]


# ------------------------------ params / glue ------------------------------ #
def _gdb_linear_params(key, in_sca, in_vec, out_sca, out_vec):
    dim_hid = max(in_vec, out_vec)   # bottleneck = 1
    k1, k2, k3 = jax.random.split(key, 3)
    return {
        "Wv1": jax.random.normal(k1, (in_vec, dim_hid), jnp.float32) / math.sqrt(in_vec),
        "Wv2": jax.random.normal(k2, (dim_hid, out_vec), jnp.float32) / math.sqrt(dim_hid),
        "Ws": jax.random.normal(k3, (dim_hid + in_sca, out_sca), jnp.float32)
              / math.sqrt(dim_hid + in_sca),
    }


def make_params(key, in_sca, in_vec, num_filters, n_component):
    nf0, nf1 = num_filters
    k1, k1d, k2, k3, k4, k5 = jax.random.split(key, 6)
    p = {
        "l1": _gdb_linear_params(k1, in_sca, in_vec, nf0, nf1),
        "l2": _gdb_linear_params(k2, nf0, nf1, nf0, nf1),
        "mu": _gdb_linear_params(k3, nf0, nf1, n_component, n_component),
        "ls": _gdb_linear_params(k4, nf0, nf1, n_component, n_component),
        "pi": _gdb_linear_params(k5, nf0, nf1, n_component, 1),
    }
    p["l1"]["Wd"] = jax.random.normal(k1d, (nf1, nf1), jnp.float32) / math.sqrt(nf1)
    return p


def _pick_tiling(n, max_tile=1024):
    """Lane-dense tile (multiple of 128); keep >=2 grid steps when N allows it
    so v7x's second TensorCore gets work.  Per-step VMEM is tiny vs 64 MiB."""
    rnd = lambda x: -(-x // 128) * 128
    n128 = max(128, rnd(n))
    if n128 == 128:
        return 128, 128
    tile = min(max(128, (n128 // 2) // 128 * 128), max_tile)
    n_pad = -(-n128 // tile) * tile
    return tile, n_pad


def _pack_weights(params):
    """Transpose all weights to feature-major and fuse the three head Wv1s."""
    def split_ws(p):
        h = p["Wv1"].shape[1]
        return p["Ws"][:h].T, p["Ws"][h:].T

    l1, l2, mu, ls, pi = params["l1"], params["l2"], params["mu"], params["ls"], params["pi"]
    l1_wsv, l1_wss = split_ws(l1)
    l2_wsv, l2_wss = split_ws(l2)
    pi_wsv, pi_wss = split_ws(pi)
    hd_wv1 = jnp.concatenate([mu["Wv1"], ls["Wv1"], pi["Wv1"]], axis=1).T   # (Hmu+Hls+Hpi, nf1)
    return [
        l1["Wv1"].T, l1["Wv2"].T, l1_wsv, l1_wss, l1["Wd"].T,
        l2["Wv1"].T, l2["Wv2"].T, l2_wsv, l2_wss,
        hd_wv1, mu["Wv2"].T, ls["Wv2"].T, pi_wsv, pi_wss,
    ]


def position_predictor_forward(params, h_compose, idx_focal, pos_compose, *, max_tile=1024):
    h_sca, h_vec = h_compose                            # (Nc, S), (Nc, V, 3)
    sca = h_sca[idx_focal]                              # gather (glue, plain JAX)
    vec = h_vec[idx_focal]                              # (N, V, 3)
    pos = pos_compose[idx_focal]                        # (N, 3)

    n = sca.shape[0]
    tile_n, n_pad = _pick_tiling(n, max_tile)
    pad = n_pad - n

    # feature-major layouts: node index N on the 128-lane axis
    sca_fm = jnp.pad(sca.T, ((0, 0), (0, pad)))                                  # (S, Np)
    vec_fm = jnp.pad(jnp.transpose(vec, (2, 1, 0)), ((0, 0), (0, 0), (0, pad)))  # (3, V, Np)
    pos_fm = jnp.pad(pos.T, ((0, 0), (0, pad)))[:, None, :]                      # (3, 1, Np)

    weights = _pack_weights(params)
    K = params["mu"]["Wv2"].shape[1]
    S, V = sca_fm.shape[0], vec_fm.shape[1]
    grid = (n_pad // tile_n,)

    w_specs = [pl.BlockSpec(w.shape, lambda i, nd=w.ndim: (0,) * nd) for w in weights]
    vec_out_spec = pl.BlockSpec((3, K, tile_n), lambda i: (0, 0, i))

    # advisory cost estimate (helps XLA schedule the surrounding gather/pad ops)
    vec_mm = {0, 1, 4, 5, 6, 9, 10, 11}                 # weights applied to 3-component slabs
    flops = sum(2 * w.shape[0] * w.shape[1] * (3 if i in vec_mm else 1)
                for i, w in enumerate(weights)) * n_pad
    transcendentals = n_pad * (8 * K + 4 * weights[4].shape[0])
    bytes_accessed = 4 * (sca_fm.size + vec_fm.size + pos_fm.size
                          + sum(w.size for w in weights)
                          + 3 * 3 * K * n_pad + K * n_pad)

    rel_mu, abs_mu, sigma, pi = pl.pallas_call(
        position_predictor_kernel,
        out_shape=(
            jax.ShapeDtypeStruct((3, K, n_pad), jnp.float32),
            jax.ShapeDtypeStruct((3, K, n_pad), jnp.float32),
            jax.ShapeDtypeStruct((3, K, n_pad), jnp.float32),
            jax.ShapeDtypeStruct((K, n_pad), jnp.float32),
        ),
        grid=grid,
        in_specs=[
            pl.BlockSpec((S, tile_n), lambda i: (0, i)),
            pl.BlockSpec((3, V, tile_n), lambda i: (0, 0, i)),
            pl.BlockSpec((3, 1, tile_n), lambda i: (0, 0, i)),
        ] + w_specs,
        out_specs=(
            vec_out_spec, vec_out_spec, vec_out_spec,
            pl.BlockSpec((K, tile_n), lambda i: (0, i)),
        ),
        compiler_params=pltpu.CompilerParams(dimension_semantics=("parallel",)),
        cost_estimate=pl.CostEstimate(flops=int(flops),
                                      transcendentals=int(transcendentals),
                                      bytes_accessed=int(bytes_accessed)),
    )(sca_fm, vec_fm, pos_fm, *weights)

    # back to PyTorch layout: (N, K, 3) and (N, K)
    rel_mu = jnp.transpose(rel_mu, (2, 1, 0))[:n]
    abs_mu = jnp.transpose(abs_mu, (2, 1, 0))[:n]
    sigma = jnp.transpose(sigma, (2, 1, 0))[:n]
    pi = pi.T[:n]
    return rel_mu, abs_mu, sigma, pi


# ----------------------------- pure-JAX reference --------------------------- #
def _ref_gdb_linear(s, v, p, need_vec=True):
    vi = jnp.einsum("nci,ch->nhi", v, p["Wv1"], precision="highest")
    vn = jnp.sqrt(jnp.sum(vi * vi, axis=-1))
    out_s = jnp.einsum("nd,do->no", jnp.concatenate([vn, s], axis=-1), p["Ws"],
                       precision="highest")
    out_v = (jnp.einsum("nhi,ho->noi", vi, p["Wv2"], precision="highest")
             if need_vec else None)
    return out_s, out_v


def _ref_vn_leaky(v, Wd):
    d = jnp.einsum("nci,co->noi", v, Wd, precision="highest")
    dot = jnp.sum(v * d, axis=-1, keepdims=True)
    dnsq = jnp.sum(d * d, axis=-1, keepdims=True)
    mask = (dot >= 0).astype(v.dtype)
    s = LEAKY_SLOPE_VEC
    return s * v + (1 - s) * (mask * v + (1 - mask) * (v - (dot / (dnsq + VN_EPS)) * d))


def reference_forward(params, h_compose, idx_focal, pos_compose):
    h_sca, h_vec = h_compose
    s, v, pos = h_sca[idx_focal], h_vec[idx_focal], pos_compose[idx_focal]
    s1, v1 = _ref_gdb_linear(s, v, params["l1"])
    v1 = _ref_vn_leaky(v1, params["l1"]["Wd"])
    s1 = jnp.where(s1 >= 0, s1, LEAKY_SLOPE_SCA * s1)
    s2, v2 = _ref_gdb_linear(s1, v1, params["l2"])
    _, mu_v = _ref_gdb_linear(s2, v2, params["mu"])
    _, ls_v = _ref_gdb_linear(s2, v2, params["ls"])
    pi_s, _ = _ref_gdb_linear(s2, v2, params["pi"], need_vec=False)
    pi = jax.nn.softmax(pi_s, axis=1)
    sigma = jnp.exp(ls_v)
    abs_mu = mu_v + pos[:, None, :]
    return mu_v, abs_mu, sigma, pi


# ----------------------------------- main ----------------------------------- #
if __name__ == "__main__":
    in_sca, in_vec = 16, 8
    num_filters = (32, 16)
    n_component = 4
    N_compose = 32

    key = jax.random.PRNGKey(0)
    kp, khs, khv, kpos, ki1, ki2 = jax.random.split(key, 6)
    params = make_params(kp, in_sca, in_vec, num_filters, n_component)

    h_sca = jax.random.normal(khs, (N_compose, in_sca), jnp.float32)
    h_vec = jax.random.normal(khv, (N_compose, in_vec, 3), jnp.float32)
    pos_compose = jax.random.normal(kpos, (N_compose, 3), jnp.float32)

    # small case (1 grid step) and a multi-tile case (2 parallel grid steps)
    for kidx, n_focal in ((ki1, 16), (ki2, 200)):
        idx_focal = jax.random.randint(kidx, (n_focal,), 0, N_compose)
        outs = position_predictor_forward(params, (h_sca, h_vec), idx_focal, pos_compose)
        outs = jax.block_until_ready(outs)
        refs = reference_forward(params, (h_sca, h_vec), idx_focal, pos_compose)
        for o, r in zip(outs, refs):
            # tolerance covers the approximate EUP reciprocal used in VNLeakyReLU
            np.testing.assert_allclose(np.asarray(o), np.asarray(r), rtol=5e-3, atol=5e-3)

    print("KERNEL_OK")
</pallas_src>

<mosaic_0001>
module attributes {stable_mosaic.version = 11 : i64} {
  func.func @position_predictor_kernel(%arg0: i32, %arg1: memref<16x128xf32, #tpu.memory_space<vmem>>, %arg2: memref<3x8x128xf32, #tpu.memory_space<vmem>>, %arg3: memref<3x1x128xf32, #tpu.memory_space<vmem>>, %arg4: memref<16x8xf32, #tpu.memory_space<vmem>>, %arg5: memref<16x16xf32, #tpu.memory_space<vmem>>, %arg6: memref<32x16xf32, #tpu.memory_space<vmem>>, %arg7: memref<32x16xf32, #tpu.memory_space<vmem>>, %arg8: memref<16x16xf32, #tpu.memory_space<vmem>>, %arg9: memref<16x16xf32, #tpu.memory_space<vmem>>, %arg10: memref<16x16xf32, #tpu.memory_space<vmem>>, %arg11: memref<32x16xf32, #tpu.memory_space<vmem>>, %arg12: memref<32x32xf32, #tpu.memory_space<vmem>>, %arg13: memref<48x16xf32, #tpu.memory_space<vmem>>, %arg14: memref<4x16xf32, #tpu.memory_space<vmem>>, %arg15: memref<4x16xf32, #tpu.memory_space<vmem>>, %arg16: memref<4x16xf32, #tpu.memory_space<vmem>>, %arg17: memref<4x32xf32, #tpu.memory_space<vmem>>, %arg18: memref<3x4x128xf32, #tpu.memory_space<vmem>>, %arg19: memref<3x4x128xf32, #tpu.memory_space<vmem>>, %arg20: memref<3x4x128xf32, #tpu.memory_space<vmem>>, %arg21: memref<4x128xf32, #tpu.memory_space<vmem>>) attributes {dimension_semantics = [#tpu.dimension_semantics<parallel>], iteration_bounds = array<i64: 1>, scalar_prefetch = 0 : i64, scratch_operands = 0 : i64, tpu.core_type = #tpu.core_type<tc>, window_params = [{transform_indices = @transform_0, window_bounds = array<i64: 16, 128>}, {transform_indices = @transform_1, window_bounds = array<i64: 3, 8, 128>}, {transform_indices = @transform_2, window_bounds = array<i64: 3, 1, 128>}, {pipeline_mode = #tpu.pipeline_mode<synchronous>, transform_indices = @transform_3, window_bounds = array<i64: 16, 8>}, {pipeline_mode = #tpu.pipeline_mode<synchronous>, transform_indices = @transform_4, window_bounds = array<i64: 16, 16>}, {pipeline_mode = #tpu.pipeline_mode<synchronous>, transform_indices = @transform_5, window_bounds = array<i64: 32, 16>}, {pipeline_mode = #tpu.pipeline_mode<synchronous>, transform_indices = @transform_6, window_bounds = array<i64: 32, 16>}, {pipeline_mode = #tpu.pipeline_mode<synchronous>, transform_indices = @transform_7, window_bounds = array<i64: 16, 16>}, {pipeline_mode = #tpu.pipeline_mode<synchronous>, transform_indices = @transform_8, window_bounds = array<i64: 16, 16>}, {pipeline_mode = #tpu.pipeline_mode<synchronous>, transform_indices = @transform_9, window_bounds = array<i64: 16, 16>}, {pipeline_mode = #tpu.pipeline_mode<synchronous>, transform_indices = @transform_10, window_bounds = array<i64: 32, 16>}, {pipeline_mode = #tpu.pipeline_mode<synchronous>, transform_indices = @transform_11, window_bounds = array<i64: 32, 32>}, {pipeline_mode = #tpu.pipeline_mode<synchronous>, transform_indices = @transform_12, window_bounds = array<i64: 48, 16>}, {pipeline_mode = #tpu.pipeline_mode<synchronous>, transform_indices = @transform_13, window_bounds = array<i64: 4, 16>}, {pipeline_mode = #tpu.pipeline_mode<synchronous>, transform_indices = @transform_14, window_bounds = array<i64: 4, 16>}, {pipeline_mode = #tpu.pipeline_mode<synchronous>, transform_indices = @transform_15, window_bounds = array<i64: 4, 16>}, {pipeline_mode = #tpu.pipeline_mode<synchronous>, transform_indices = @transform_16, window_bounds = array<i64: 4, 32>}, {transform_indices = @transform_17, window_bounds = array<i64: 3, 4, 128>}, {transform_indices = @transform_18, window_bounds = array<i64: 3, 4, 128>}, {transform_indices = @transform_19, window_bounds = array<i64: 3, 4, 128>}, {transform_indices = @transform_20, window_bounds = array<i64: 4, 128>}]} {
    %c0 = arith.constant 0 : index
    %c0_0 = arith.constant 0 : index
    %0 = vector.load %arg1[%c0, %c0_0] : memref<16x128xf32, #tpu.memory_space<vmem>>, vector<16x128xf32>
    %c0_1 = arith.constant 0 : index
    %c0_2 = arith.constant 0 : index
    %c0_3 = arith.constant 0 : index
    %1 = vector.load %arg2[%c0_1, %c0_2, %c0_3] : memref<3x8x128xf32, #tpu.memory_space<vmem>>, vector<1x8x128xf32>
    %2 = vector.shape_cast %1 : vector<1x8x128xf32> to vector<8x128xf32>
    %c1 = arith.constant 1 : index
    %c0_4 = arith.constant 0 : index
    %c0_5 = arith.constant 0 : index
    %3 = vector.load %arg2[%c1, %c0_4, %c0_5] : memref<3x8x128xf32, #tpu.memory_space<vmem>>, vector<1x8x128xf32>
    %4 = vector.shape_cast %3 : vector<1x8x128xf32> to vector<8x128xf32>
    %c2 = arith.constant 2 : index
    %c0_6 = arith.constant 0 : index
    %c0_7 = arith.constant 0 : index
    %5 = vector.load %arg2[%c2, %c0_6, %c0_7] : memref<3x8x128xf32, #tpu.memory_space<vmem>>, vector<1x8x128xf32>
    %6 = vector.shape_cast %5 : vector<1x8x128xf32> to vector<8x128xf32>
    %7 = tpu.concatenate %2, %4, %6 in 1 : vector<8x128xf32>, vector<8x128xf32>, vector<8x128xf32> -> vector<8x384xf32>
    %c0_8 = arith.constant 0 : index
    %c0_9 = arith.constant 0 : index
    %8 = vector.load %arg4[%c0_8, %c0_9] : memref<16x8xf32, #tpu.memory_space<vmem>>, vector<16x8xf32>
    %c0_10 = arith.constant 0 : index
    %c0_11 = arith.constant 0 : index
    %9 = vector.load %arg5[%c0_10, %c0_11] : memref<16x16xf32, #tpu.memory_space<vmem>>, vector<16x16xf32>
    %c0_12 = arith.constant 0 : index
    %c0_13 = arith.constant 0 : index
    %10 = vector.load %arg6[%c0_12, %c0_13] : memref<32x16xf32, #tpu.memory_space<vmem>>, vector<32x16xf32>
    %c0_14 = arith.constant 0 : index
    %c0_15 = arith.constant 0 : index
    %11 = vector.load %arg7[%c0_14, %c0_15] : memref<32x16xf32, #tpu.memory_space<vmem>>, vector<32x16xf32>
    %cst = arith.constant dense<0.000000e+00> : vector<16x384xf32>
    %12 = tpu.matmul %8, %7, %cst {dimension_numbers = #tpu.dot_dimension_numbers<[1], [0], [0], [1], [0, 0, 1, 1], [], []>} : vector<16x8xf32>, vector<8x384xf32>, vector<16x384xf32> -> vector<16x384xf32>
    %13 = vector.extract_strided_slice %12 {offsets = [0, 0], sizes = [16, 128], strides = [1, 1]} : vector<16x384xf32> to vector<16x128xf32>
    %14 = vector.extract_strided_slice %12 {offsets = [0, 128], sizes = [16, 128], strides = [1, 1]} : vector<16x384xf32> to vector<16x128xf32>
    %15 = vector.extract_strided_slice %12 {offsets = [0, 256], sizes = [16, 128], strides = [1, 1]} : vector<16x384xf32> to vector<16x128xf32>
    %16 = arith.mulf %13, %13 : vector<16x128xf32>
    %17 = arith.mulf %14, %14 : vector<16x128xf32>
    %18 = arith.addf %16, %17 : vector<16x128xf32>
    %19 = arith.mulf %15, %15 : vector<16x128xf32>
    %20 = arith.addf %18, %19 : vector<16x128xf32>
    %21 = math.sqrt %20 : vector<16x128xf32>
    %cst_16 = arith.constant dense<0.000000e+00> : vector<32x128xf32>
    %22 = tpu.matmul %10, %21, %cst_16 {dimension_numbers = #tpu.dot_dimension_numbers<[1], [0], [0], [1], [0, 0, 1, 1], [], []>} : vector<32x16xf32>, vector<16x128xf32>, vector<32x128xf32> -> vector<32x128xf32>
    %cst_17 = arith.constant dense<0.000000e+00> : vector<32x128xf32>
    %23 = tpu.matmul %11, %0, %cst_17 {dimension_numbers = #tpu.dot_dimension_numbers<[1], [0], [0], [1], [0, 0, 1, 1], [], []>} : vector<32x16xf32>, vector<16x128xf32>, vector<32x128xf32> -> vector<32x128xf32>
    %24 = arith.addf %22, %23 : vector<32x128xf32>
    %cst_18 = arith.constant dense<0.000000e+00> : vector<16x384xf32>
    %25 = tpu.matmul %9, %12, %cst_18 {dimension_numbers = #tpu.dot_dimension_numbers<[1], [0], [0], [1], [0, 0, 1, 1], [], []>} : vector<16x16xf32>, vector<16x384xf32>, vector<16x384xf32> -> vector<16x384xf32>
    %c0_19 = arith.constant 0 : index
    %c0_20 = arith.constant 0 : index
    %26 = vector.load %arg8[%c0_19, %c0_20] : memref<16x16xf32, #tpu.memory_space<vmem>>, vector<16x16xf32>
    %cst_21 = arith.constant dense<0.000000e+00> : vector<16x384xf32>
    %27 = tpu.matmul %26, %25, %cst_21 {dimension_numbers = #tpu.dot_dimension_numbers<[1], [0], [0], [1], [0, 0, 1, 1], [], []>} : vector<16x16xf32>, vector<16x384xf32>, vector<16x384xf32> -> vector<16x384xf32>
    %28 = vector.extract_strided_slice %25 {offsets = [0, 0], sizes = [16, 128], strides = [1, 1]} : vector<16x384xf32> to vector<16x128xf32>
    %29 = vector.extract_strided_slice %25 {offsets = [0, 128], sizes = [16, 128], strides = [1, 1]} : vector<16x384xf32> to vector<16x128xf32>
    %30 = vector.extract_strided_slice %25 {offsets = [0, 256], sizes = [16, 128], strides = [1, 1]} : vector<16x384xf32> to vector<16x128xf32>
    %31 = vector.extract_strided_slice %27 {offsets = [0, 0], sizes = [16, 128], strides = [1, 1]} : vector<16x384xf32> to vector<16x128xf32>
    %32 = vector.extract_strided_slice %27 {offsets = [0, 128], sizes = [16, 128], strides = [1, 1]} : vector<16x384xf32> to vector<16x128xf32>
    %33 = vector.extract_strided_slice %27 {offsets = [0, 256], sizes = [16, 128], strides = [1, 1]} : vector<16x384xf32> to vector<16x128xf32>
    %34 = arith.mulf %28, %31 : vector<16x128xf32>
    %35 = arith.mulf %29, %32 : vector<16x128xf32>
    %36 = arith.addf %34, %35 : vector<16x128xf32>
    %37 = arith.mulf %30, %33 : vector<16x128xf32>
    %38 = arith.addf %36, %37 : vector<16x128xf32>
    %39 = arith.mulf %31, %31 : vector<16x128xf32>
    %40 = arith.mulf %32, %32 : vector<16x128xf32>
    %41 = arith.addf %39, %40 : vector<16x128xf32>
    %42 = arith.mulf %33, %33 : vector<16x128xf32>
    %43 = arith.addf %41, %42 : vector<16x128xf32>
    %cst_22 = arith.constant 9.99999997E-7 : f32
    %44 = vector.broadcast %cst_22 : f32 to vector<16x128xf32>
    %45 = arith.addf %43, %44 : vector<16x128xf32>
    %46 = tpu.reciprocal %45 {approx = true} : vector<16x128xf32> -> vector<16x128xf32>
    %47 = arith.mulf %38, %46 : vector<16x128xf32>
    %cst_23 = arith.constant 0.000000e+00 : f32
    %48 = vector.broadcast %cst_23 : f32 to vector<16x128xf32>
    %49 = arith.cmpf olt, %38, %48 : vector<16x128xf32>
    %cst_24 = arith.constant 0.000000e+00 : f32
    %50 = vector.broadcast %cst_24 : f32 to vector<16x128xf32>
    %51 = arith.select %49, %47, %50 : vector<16x128xi1>, vector<16x128xf32>
    %cst_25 = arith.constant 8.000000e-01 : f32
    %52 = vector.broadcast %cst_25 : f32 to vector<16x128xf32>
    %53 = arith.mulf %52, %51 : vector<16x128xf32>
    %54 = tpu.concatenate %53, %53, %53 in 1 : vector<16x128xf32>, vector<16x128xf32>, vector<16x128xf32> -> vector<16x384xf32>
    %55 = arith.mulf %54, %27 : vector<16x384xf32>
    %56 = arith.subf %25, %55 : vector<16x384xf32>
    %cst_26 = arith.constant 0.000000e+00 : f32
    %57 = vector.broadcast %cst_26 : f32 to vector<32x128xf32>
    %58 = arith.cmpf oge, %24, %57 : vector<32x128xf32>
    %cst_27 = arith.constant 0.00999999977 : f32
    %59 = vector.broadcast %cst_27 : f32 to vector<32x128xf32>
    %60 = arith.mulf %59, %24 : vector<32x128xf32>
    %61 = arith.select %58, %24, %60 : vector<32x128xi1>, vector<32x128xf32>
    %c0_28 = arith.constant 0 : index
    %c0_29 = arith.constant 0 : index
    %62 = vector.load %arg9[%c0_28, %c0_29] : memref<16x16xf32, #tpu.memory_space<vmem>>, vector<16x16xf32>
    %c0_30 = arith.constant 0 : index
    %c0_31 = arith.constant 0 : index
    %63 = vector.load %arg10[%c0_30, %c0_31] : memref<16x16xf32, #tpu.memory_space<vmem>>, vector<16x16xf32>
    %c0_32 = arith.constant 0 : index
    %c0_33 = arith.constant 0 : index
    %64 = vector.load %arg11[%c0_32, %c0_33] : memref<32x16xf32, #tpu.memory_space<vmem>>, vector<32x16xf32>
    %c0_34 = arith.constant 0 : index
    %c0_35 = arith.constant 0 : index
    %65 = vector.load %arg12[%c0_34, %c0_35] : memref<32x32xf32, #tpu.memory_space<vmem>>, vector<32x32xf32>
    %cst_36 = arith.constant dense<0.000000e+00> : vector<16x384xf32>
    %66 = tpu.matmul %62, %56, %cst_36 {dimension_numbers = #tpu.dot_dimension_numbers<[1], [0], [0], [1], [0, 0, 1, 1], [], []>} : vector<16x16xf32>, vector<16x384xf32>, vector<16x384xf32> -> vector<16x384xf32>
    %67 = vector.extract_strided_slice %66 {offsets = [0, 0], sizes = [16, 128], strides = [1, 1]} : vector<16x384xf32> to vector<16x128xf32>
    %68 = vector.extract_strided_slice %66 {offsets = [0, 128], sizes = [16, 128], strides = [1, 1]} : vector<16x384xf32> to vector<16x128xf32>
    %69 = vector.extract_strided_slice %66 {offsets = [0, 256], sizes = [16, 128], strides = [1, 1]} : vector<16x384xf32> to vector<16x128xf32>
    %70 = arith.mulf %67, %67 : vector<16x128xf32>
    %71 = arith.mulf %68, %68 : vector<16x128xf32>
    %72 = arith.addf %70, %71 : vector<16x128xf32>
    %73 = arith.mulf %69, %69 : vector<16x128xf32>
    %74 = arith.addf %72, %73 : vector<16x128xf32>
    %75 = math.sqrt %74 : vector<16x128xf32>
    %cst_37 = arith.constant dense<0.000000e+00> : vector<32x128xf32>
    %76 = tpu.matmul %64, %75, %cst_37 {dimension_numbers = #tpu.dot_dimension_numbers<[1], [0], [0], [1], [0, 0, 1, 1], [], []>} : vector<32x16xf32>, vector<16x128xf32>, vector<32x128xf32> -> vector<32x128xf32>
    %cst_38 = arith.constant dense<0.000000e+00> : vector<32x128xf32>
    %77 = tpu.matmul %65, %61, %cst_38 {dimension_numbers = #tpu.dot_dimension_numbers<[1], [0], [0], [1], [0, 0, 1, 1], [], []>} : vector<32x32xf32>, vector<32x128xf32>, vector<32x128xf32> -> vector<32x128xf32>
    %78 = arith.addf %76, %77 : vector<32x128xf32>
    %cst_39 = arith.constant dense<0.000000e+00> : vector<16x384xf32>
    %79 = tpu.matmul %63, %66, %cst_39 {dimension_numbers = #tpu.dot_dimension_numbers<[1], [0], [0], [1], [0, 0, 1, 1], [], []>} : vector<16x16xf32>, vector<16x384xf32>, vector<16x384xf32> -> vector<16x384xf32>
    %c0_40 = arith.constant 0 : index
    %c0_41 = arith.constant 0 : index
    %80 = vector.load %arg13[%c0_40, %c0_41] : memref<48x16xf32, #tpu.memory_space<vmem>>, vector<48x16xf32>
    %cst_42 = arith.constant dense<0.000000e+00> : vector<48x384xf32>
    %81 = tpu.matmul %80, %79, %cst_42 {dimension_numbers = #tpu.dot_dimension_numbers<[1], [0], [0], [1], [0, 0, 1, 1], [], []>} : vector<48x16xf32>, vector<16x384xf32>, vector<48x384xf32> -> vector<48x384xf32>
    %82 = vector.extract_strided_slice %81 {offsets = [0, 0], sizes = [16, 384], strides = [1, 1]} : vector<48x384xf32> to vector<16x384xf32>
    %83 = vector.extract_strided_slice %81 {offsets = [16, 0], sizes = [16, 384], strides = [1, 1]} : vector<48x384xf32> to vector<16x384xf32>
    %84 = vector.extract_strided_slice %81 {offsets = [32, 0], sizes = [16, 384], strides = [1, 1]} : vector<48x384xf32> to vector<16x384xf32>
    %c0_43 = arith.constant 0 : index
    %c0_44 = arith.constant 0 : index
    %85 = vector.load %arg14[%c0_43, %c0_44] : memref<4x16xf32, #tpu.memory_space<vmem>>, vector<4x16xf32>
    %cst_45 = arith.constant dense<0.000000e+00> : vector<4x384xf32>
    %86 = tpu.matmul %85, %82, %cst_45 {dimension_numbers = #tpu.dot_dimension_numbers<[1], [0], [0], [1], [0, 0, 1, 1], [], []>} : vector<4x16xf32>, vector<16x384xf32>, vector<4x384xf32> -> vector<4x384xf32>
    %c0_46 = arith.constant 0 : index
    %c0_47 = arith.constant 0 : index
    %87 = vector.load %arg15[%c0_46, %c0_47] : memref<4x16xf32, #tpu.memory_space<vmem>>, vector<4x16xf32>
    %cst_48 = arith.constant dense<0.000000e+00> : vector<4x384xf32>
    %88 = tpu.matmul %87, %83, %cst_48 {dimension_numbers = #tpu.dot_dimension_numbers<[1], [0], [0], [1], [0, 0, 1, 1], [], []>} : vector<4x16xf32>, vector<16x384xf32>, vector<4x384xf32> -> vector<4x384xf32>
    %89 = math.exp %88 : vector<4x384xf32>
    %90 = vector.extract_strided_slice %84 {offsets = [0, 0], sizes = [16, 128], strides = [1, 1]} : vector<16x384xf32> to vector<16x128xf32>
    %91 = vector.extract_strided_slice %84 {offsets = [0, 128], sizes = [16, 128], strides = [1, 1]} : vector<16x384xf32> to vector<16x128xf32>
    %92 = vector.extract_strided_slice %84 {offsets = [0, 256], sizes = [16, 128], strides = [1, 1]} : vector<16x384xf32> to vector<16x128xf32>
    %93 = arith.mulf %90, %90 : vector<16x128xf32>
    %94 = arith.mulf %91, %91 : vector<16x128xf32>
    %95 = arith.addf %93, %94 : vector<16x128xf32>
    %96 = arith.mulf %92, %92 : vector<16x128xf32>
    %97 = arith.addf %95, %96 : vector<16x128xf32>
    %98 = math.sqrt %97 : vector<16x128xf32>
    %c0_49 = arith.constant 0 : index
    %c0_50 = arith.constant 0 : index
    %99 = vector.load %arg16[%c0_49, %c0_50] : memref<4x16xf32, #tpu.memory_space<vmem>>, vector<4x16xf32>
    %cst_51 = arith.constant dense<0.000000e+00> : vector<4x128xf32>
    %100 = tpu.matmul %99, %98, %cst_51 {dimension_numbers = #tpu.dot_dimension_numbers<[1], [0], [0], [1], [0, 0, 1, 1], [], []>} : vector<4x16xf32>, vector<16x128xf32>, vector<4x128xf32> -> vector<4x128xf32>
    %c0_52 = arith.constant 0 : index
    %c0_53 = arith.constant 0 : index
    %101 = vector.load %arg17[%c0_52, %c0_53] : memref<4x32xf32, #tpu.memory_space<vmem>>, vector<4x32xf32>
    %cst_54 = arith.constant dense<0.000000e+00> : vector<4x128xf32>
    %102 = tpu.matmul %101, %78, %cst_54 {dimension_numbers = #tpu.dot_dimension_numbers<[1], [0], [0], [1], [0, 0, 1, 1], [], []>} : vector<4x32xf32>, vector<32x128xf32>, vector<4x128xf32> -> vector<4x128xf32>
    %103 = arith.addf %100, %102 : vector<4x128xf32>
    %cst_55 = arith.constant dense<0xFF800000> : vector<128xf32>
    %104 = vector.multi_reduction <maximumf>, %103, %cst_55 [0] : vector<4x128xf32> to vector<128xf32>
    %105 = vector.shape_cast %104 : vector<128xf32> to vector<1x128xf32>
    %106 = vector.broadcast %105 : vector<1x128xf32> to vector<4x128xf32>
    %107 = arith.subf %103, %106 : vector<4x128xf32>
    %108 = math.exp %107 : vector<4x128xf32>
    %cst_56 = arith.constant dense<0.000000e+00> : vector<128xf32>
    %109 = vector.multi_reduction <add>, %108, %cst_56 [0] : vector<4x128xf32> to vector<128xf32>
    %110 = vector.shape_cast %109 : vector<128xf32> to vector<1x128xf32>
    %111 = vector.broadcast %110 : vector<1x128xf32> to vector<4x128xf32>
    %112 = arith.divf %108, %111 : vector<4x128xf32>
    %c0_57 = arith.constant 0 : index
    %c0_58 = arith.constant 0 : index
    %113 = vector.load %arg21[%c0_57, %c0_58] : memref<4x128xf32, #tpu.memory_space<vmem>>, vector<4x128xf32>
    tpu.vector_store %arg21[%c0_57, %c0_58], %112 {strides = array<i32>} : memref<4x128xf32, #tpu.memory_space<vmem>>, vector<4x128xf32>,
    %114 = vector.extract_strided_slice %86 {offsets = [0, 0], sizes = [4, 128], strides = [1, 1]} : vector<4x384xf32> to vector<4x128xf32>
    %c0_59 = arith.constant 0 : index
    %c0_60 = arith.constant 0 : index
    %c0_61 = arith.constant 0 : index
    %115 = vector.load %arg18[%c0_59, %c0_60, %c0_61] : memref<3x4x128xf32, #tpu.memory_space<vmem>>, vector<1x4x128xf32>
    %116 = vector.shape_cast %115 : vector<1x4x128xf32> to vector<4x128xf32>
    %117 = vector.shape_cast %114 : vector<4x128xf32> to vector<1x4x128xf32>
    tpu.vector_store %arg18[%c0_59, %c0_60, %c0_61], %117 {strides = array<i32>} : memref<3x4x128xf32, #tpu.memory_space<vmem>>, vector<1x4x128xf32>,
    %c0_62 = arith.constant 0 : index
    %c0_63 = arith.constant 0 : index
    %c0_64 = arith.constant 0 : index
    %118 = vector.load %arg3[%c0_62, %c0_63, %c0_64] : memref<3x1x128xf32, #tpu.memory_space<vmem>>, vector<1x1x128xf32>
    %119 = vector.shape_cast %118 : vector<1x1x128xf32> to vector<1x128xf32>
    %120 = vector.broadcast %119 : vector<1x128xf32> to vector<4x128xf32>
    %121 = arith.addf %114, %120 : vector<4x128xf32>
    %c0_65 = arith.constant 0 : index
    %c0_66 = arith.constant 0 : index
    %c0_67 = arith.constant 0 : index
    %122 = vector.load %arg19[%c0_65, %c0_66, %c0_67] : memref<3x4x128xf32, #tpu.memory_space<vmem>>, vector<1x4x128xf32>
    %123 = vector.shape_cast %122 : vector<1x4x128xf32> to vector<4x128xf32>
    %124 = vector.shape_cast %121 : vector<4x128xf32> to vector<1x4x128xf32>
    tpu.vector_store %arg19[%c0_65, %c0_66, %c0_67], %124 {strides = array<i32>} : memref<3x4x128xf32, #tpu.memory_space<vmem>>, vector<1x4x128xf32>,
    %125 = vector.extract_strided_slice %89 {offsets = [0, 0], sizes = [4, 128], strides = [1, 1]} : vector<4x384xf32> to vector<4x128xf32>
    %c0_68 = arith.constant 0 : index
    %c0_69 = arith.constant 0 : index
    %c0_70 = arith.constant 0 : index
    %126 = vector.load %arg20[%c0_68, %c0_69, %c0_70] : memref<3x4x128xf32, #tpu.memory_space<vmem>>, vector<1x4x128xf32>
    %127 = vector.shape_cast %126 : vector<1x4x128xf32> to vector<4x128xf32>
    %128 = vector.shape_cast %125 : vector<4x128xf32> to vector<1x4x128xf32>
    tpu.vector_store %arg20[%c0_68, %c0_69, %c0_70], %128 {strides = array<i32>} : memref<3x4x128xf32, #tpu.memory_space<vmem>>, vector<1x4x128xf32>,
    %129 = vector.extract_strided_slice %86 {offsets = [0, 128], sizes = [4, 128], strides = [1, 1]} : vector<4x384xf32> to vector<4x128xf32>
    %c1_71 = arith.constant 1 : index
    %c0_72 = arith.constant 0 : index
    %c0_73 = arith.constant 0 : index
    %130 = vector.load %arg18[%c1_71, %c0_72, %c0_73] : memref<3x4x128xf32, #tpu.memory_space<vmem>>, vector<1x4x128xf32>
    %131 = vector.shape_cast %130 : vector<1x4x128xf32> to vector<4x128xf32>
    %132 = vector.shape_cast %129 : vector<4x128xf32> to vector<1x4x128xf32>
    tpu.vector_store %arg18[%c1_71, %c0_72, %c0_73], %132 {strides = array<i32>} : memref<3x4x128xf32, #tpu.memory_space<vmem>>, vector<1x4x128xf32>,
    %c1_74 = arith.constant 1 : index
    %c0_75 = arith.constant 0 : index
    %c0_76 = arith.constant 0 : index
    %133 = vector.load %arg3[%c1_74, %c0_75, %c0_76] : memref<3x1x128xf32, #tpu.memory_space<vmem>>, vector<1x1x128xf32>
    %134 = vector.shape_cast %133 : vector<1x1x128xf32> to vector<1x128xf32>
    %135 = vector.broadcast %134 : vector<1x128xf32> to vector<4x128xf32>
    %136 = arith.addf %129, %135 : vector<4x128xf32>
    %c1_77 = arith.constant 1 : index
    %c0_78 = arith.constant 0 : index
    %c0_79 = arith.constant 0 : index
    %137 = vector.load %arg19[%c1_77, %c0_78, %c0_79] : memref<3x4x128xf32, #tpu.memory_space<vmem>>, vector<1x4x128xf32>
    %138 = vector.shape_cast %137 : vector<1x4x128xf32> to vector<4x128xf32>
    %139 = vector.shape_cast %136 : vector<4x128xf32> to vector<1x4x128xf32>
    tpu.vector_store %arg19[%c1_77, %c0_78, %c0_79], %139 {strides = array<i32>} : memref<3x4x128xf32, #tpu.memory_space<vmem>>, vector<1x4x128xf32>,
    %140 = vector.extract_strided_slice %89 {offsets = [0, 128], sizes = [4, 128], strides = [1, 1]} : vector<4x384xf32> to vector<4x128xf32>
    %c1_80 = arith.constant 1 : index
    %c0_81 = arith.constant 0 : index
    %c0_82 = arith.constant 0 : index
    %141 = vector.load %arg20[%c1_80, %c0_81, %c0_82] : memref<3x4x128xf32, #tpu.memory_space<vmem>>, vector<1x4x128xf32>
    %142 = vector.shape_cast %141 : vector<1x4x128xf32> to vector<4x128xf32>
    %143 = vector.shape_cast %140 : vector<4x128xf32> to vector<1x4x128xf32>
    tpu.vector_store %arg20[%c1_80, %c0_81, %c0_82], %143 {strides = array<i32>} : memref<3x4x128xf32, #tpu.memory_space<vmem>>, vector<1x4x128xf32>,
    %144 = vector.extract_strided_slice %86 {offsets = [0, 256], sizes = [4, 128], strides = [1, 1]} : vector<4x384xf32> to vector<4x128xf32>
    %c2_83 = arith.constant 2 : index
    %c0_84 = arith.constant 0 : index
    %c0_85 = arith.constant 0 : index
    %145 = vector.load %arg18[%c2_83, %c0_84, %c0_85] : memref<3x4x128xf32, #tpu.memory_space<vmem>>, vector<1x4x128xf32>
    %146 = vector.shape_cast %145 : vector<1x4x128xf32> to vector<4x128xf32>
    %147 = vector.shape_cast %144 : vector<4x128xf32> to vector<1x4x128xf32>
    tpu.vector_store %arg18[%c2_83, %c0_84, %c0_85], %147 {strides = array<i32>} : memref<3x4x128xf32, #tpu.memory_space<vmem>>, vector<1x4x128xf32>,
    %c2_86 = arith.constant 2 : index
    %c0_87 = arith.constant 0 : index
    %c0_88 = arith.constant 0 : index
    %148 = vector.load %arg3[%c2_86, %c0_87, %c0_88] : memref<3x1x128xf32, #tpu.memory_space<vmem>>, vector<1x1x128xf32>
    %149 = vector.shape_cast %148 : vector<1x1x128xf32> to vector<1x128xf32>
    %150 = vector.broadcast %149 : vector<1x128xf32> to vector<4x128xf32>
    %151 = arith.addf %144, %150 : vector<4x128xf32>
    %c2_89 = arith.constant 2 : index
    %c0_90 = arith.constant 0 : index
    %c0_91 = arith.constant 0 : index
    %152 = vector.load %arg19[%c2_89, %c0_90, %c0_91] : memref<3x4x128xf32, #tpu.memory_space<vmem>>, vector<1x4x128xf32>
    %153 = vector.shape_cast %152 : vector<1x4x128xf32> to vector<4x128xf32>
    %154 = vector.shape_cast %151 : vector<4x128xf32> to vector<1x4x128xf32>
    tpu.vector_store %arg19[%c2_89, %c0_90, %c0_91], %154 {strides = array<i32>} : memref<3x4x128xf32, #tpu.memory_space<vmem>>, vector<1x4x128xf32>,
    %155 = vector.extract_strided_slice %89 {offsets = [0, 256], sizes = [4, 128], strides = [1, 1]} : vector<4x384xf32> to vector<4x128xf32>
    %c2_92 = arith.constant 2 : index
    %c0_93 = arith.constant 0 : index
    %c0_94 = arith.constant 0 : index
    %156 = vector.load %arg20[%c2_92, %c0_93, %c0_94] : memref<3x4x128xf32, #tpu.memory_space<vmem>>, vector<1x4x128xf32>
    %157 = vector.shape_cast %156 : vector<1x4x128xf32> to vector<4x128xf32>
    %158 = vector.shape_cast %155 : vector<4x128xf32> to vector<1x4x128xf32>
    tpu.vector_store %arg20[%c2_92, %c0_93, %c0_94], %158 {strides = array<i32>} : memref<3x4x128xf32, #tpu.memory_space<vmem>>, vector<1x4x128xf32>,
    return
  }
  func.func @transform_0(%arg0: i32) -> (i32, i32) {
    %c0_i32 = arith.constant 0 : i32
    %c0_i32_0 = arith.constant 0 : i32
    return %c0_i32, %arg0 : i32, i32
  }
  func.func @transform_1(%arg0: i32) -> (i32, i32, i32) {
    %c0_i32 = arith.constant 0 : i32
    %c0_i32_0 = arith.constant 0 : i32
    %c0_i32_1 = arith.constant 0 : i32
    return %c0_i32, %c0_i32_0, %arg0 : i32, i32, i32
  }
  func.func @transform_2(%arg0: i32) -> (i32, i32, i32) {
    %c0_i32 = arith.constant 0 : i32
    %c0_i32_0 = arith.constant 0 : i32
    %c0_i32_1 = arith.constant 0 : i32
    return %c0_i32, %c0_i32_0, %arg0 : i32, i32, i32
  }
  func.func @transform_3(%arg0: i32) -> (i32, i32) {
    %c0_i32 = arith.constant 0 : i32
    %c0_i32_0 = arith.constant 0 : i32
    %c0_i32_1 = arith.constant 0 : i32
    return %c0_i32, %c0_i32_0 : i32, i32
  }
  func.func @transform_4(%arg0: i32) -> (i32, i32) {
    %c0_i32 = arith.constant 0 : i32
    %c0_i32_0 = arith.constant 0 : i32
    %c0_i32_1 = arith.constant 0 : i32
    return %c0_i32, %c0_i32_0 : i32, i32
  }
  func.func @transform_5(%arg0: i32) -> (i32, i32) {
    %c0_i32 = arith.constant 0 : i32
    %c0_i32_0 = arith.constant 0 : i32
    %c0_i32_1 = arith.constant 0 : i32
    return %c0_i32, %c0_i32_0 : i32, i32
  }
  func.func @transform_6(%arg0: i32) -> (i32, i32) {
    %c0_i32 = arith.constant 0 : i32
    %c0_i32_0 = arith.constant 0 : i32
    %c0_i32_1 = arith.constant 0 : i32
    return %c0_i32, %c0_i32_0 : i32, i32
  }
  func.func @transform_7(%arg0: i32) -> (i32, i32) {
    %c0_i32 = arith.constant 0 : i32
    %c0_i32_0 = arith.constant 0 : i32
    %c0_i32_1 = arith.constant 0 : i32
    return %c0_i32, %c0_i32_0 : i32, i32
  }
  func.func @transform_8(%arg0: i32) -> (i32, i32) {
    %c0_i32 = arith.constant 0 : i32
    %c0_i32_0 = arith.constant 0 : i32
    %c0_i32_1 = arith.constant 0 : i32
    return %c0_i32, %c0_i32_0 : i32, i32
  }
  func.func @transform_9(%arg0: i32) -> (i32, i32) {
    %c0_i32 = arith.constant 0 : i32
    %c0_i32_0 = arith.constant 0 : i32
    %c0_i32_1 = arith.constant 0 : i32
    return %c0_i32, %c0_i32_0 : i32, i32
  }
  func.func @transform_10(%arg0: i32) -> (i32, i32) {
    %c0_i32 = arith.constant 0 : i32
    %c0_i32_0 = arith.constant 0 : i32
    %c0_i32_1 = arith.constant 0 : i32
    return %c0_i32, %c0_i32_0 : i32, i32
  }
  func.func @transform_11(%arg0: i32) -> (i32, i32) {
    %c0_i32 = arith.constant 0 : i32
    %c0_i32_0 = arith.constant 0 : i32
    %c0_i32_1 = arith.constant 0 : i32
    return %c0_i32, %c0_i32_0 : i32, i32
  }
  func.func @transform_12(%arg0: i32) -> (i32, i32) {
    %c0_i32 = arith.constant 0 : i32
    %c0_i32_0 = arith.constant 0 : i32
    %c0_i32_1 = arith.constant 0 : i32
    return %c0_i32, %c0_i32_0 : i32, i32
  }
  func.func @transform_13(%arg0: i32) -> (i32, i32) {
    %c0_i32 = arith.constant 0 : i32
    %c0_i32_0 = arith.constant 0 : i32
    %c0_i32_1 = arith.constant 0 : i32
    return %c0_i32, %c0_i32_0 : i32, i32
  }
  func.func @transform_14(%arg0: i32) -> (i32, i32) {
    %c0_i32 = arith.constant 0 : i32
    %c0_i32_0 = arith.constant 0 : i32
    %c0_i32_1 = arith.constant 0 : i32
    return %c0_i32, %c0_i32_0 : i32, i32
  }
  func.func @transform_15(%arg0: i32) -> (i32, i32) {
    %c0_i32 = arith.constant 0 : i32
    %c0_i32_0 = arith.constant 0 : i32
    %c0_i32_1 = arith.constant 0 : i32
    return %c0_i32, %c0_i32_0 : i32, i32
  }
  func.func @transform_16(%arg0: i32) -> (i32, i32) {
    %c0_i32 = arith.constant 0 : i32
    %c0_i32_0 = arith.constant 0 : i32
    %c0_i32_1 = arith.constant 0 : i32
    return %c0_i32, %c0_i32_0 : i32, i32
  }
  func.func @transform_17(%arg0: i32) -> (i32, i32, i32) {
    %c0_i32 = arith.constant 0 : i32
    %c0_i32_0 = arith.constant 0 : i32
    %c0_i32_1 = arith.constant 0 : i32
    return %c0_i32, %c0_i32_0, %arg0 : i32, i32, i32
  }
  func.func @transform_18(%arg0: i32) -> (i32, i32, i32) {
    %c0_i32 = arith.constant 0 : i32
    %c0_i32_0 = arith.constant 0 : i32
    %c0_i32_1 = arith.constant 0 : i32
    return %c0_i32, %c0_i32_0, %arg0 : i32, i32, i32
  }
  func.func @transform_19(%arg0: i32) -> (i32, i32, i32) {
    %c0_i32 = arith.constant 0 : i32
    %c0_i32_0 = arith.constant 0 : i32
    %c0_i32_1 = arith.constant 0 : i32
    return %c0_i32, %c0_i32_0, %arg0 : i32, i32, i32
  }
  func.func @transform_20(%arg0: i32) -> (i32, i32) {
    %c0_i32 = arith.constant 0 : i32
    %c0_i32_0 = arith.constant 0 : i32
    return %c0_i32, %arg0 : i32, i32
  }
}

</mosaic_0001>

<llo_original>
// kernel: tpu_custom_call.1
$region0: #{tpu_custom_call.1}
  #allocation0 [shape = 'u32[]', space=smem, size = 0x4, offset = 0x4, fixed_abs, tag = 'smem constant byte address 0x4 - core index']
  #allocation1 [shape = 'u32[144,128]{1,0:T(1,128)}', space=vmem, size = 0x12000, scoped, tag = 'internal scratch']
  %s0 = inlined_call_operand.vmem [shape: f32[16,128], index: 0, kind: input, shape index: {}]
  %s1 = inlined_call_operand.vmem [shape: f32[3,8,128], index: 1, kind: input, shape index: {}]
  %s2 = inlined_call_operand.vmem [shape: f32[3,1,128], index: 2, kind: input, shape index: {}]
  %s3 = inlined_call_operand.vmem [shape: f32[16,8], index: 3, kind: input, shape index: {}]
  %s4 = inlined_call_operand.vmem [shape: f32[16,16], index: 4, kind: input, shape index: {}]
  %s5 = inlined_call_operand.vmem [shape: f32[32,16], index: 5, kind: input, shape index: {}]
  %s6 = inlined_call_operand.vmem [shape: f32[32,16], index: 6, kind: input, shape index: {}]
  %s7 = inlined_call_operand.vmem [shape: f32[16,16], index: 7, kind: input, shape index: {}]
  %s8 = inlined_call_operand.vmem [shape: f32[16,16], index: 8, kind: input, shape index: {}]
  %s9 = inlined_call_operand.vmem [shape: f32[16,16], index: 9, kind: input, shape index: {}]
  %s10 = inlined_call_operand.vmem [shape: f32[32,16], index: 10, kind: input, shape index: {}]
  %s11 = inlined_call_operand.vmem [shape: f32[32,32], index: 11, kind: input, shape index: {}]
  %s12 = inlined_call_operand.vmem [shape: f32[48,16], index: 12, kind: input, shape index: {}]
  %s13 = inlined_call_operand.vmem [shape: f32[4,16], index: 13, kind: input, shape index: {}]
  %s14 = inlined_call_operand.vmem [shape: f32[4,16], index: 14, kind: input, shape index: {}]
  %s15 = inlined_call_operand.vmem [shape: f32[4,16], index: 15, kind: input, shape index: {}]
  %s16 = inlined_call_operand.vmem [shape: f32[4,32], index: 16, kind: input, shape index: {}]
  %s17 = inlined_call_operand.hbm [shape: f32[3,4,128], index: 17, kind: output, shape index: {0}]
  %s18 = inlined_call_operand.hbm [shape: f32[3,4,128], index: 18, kind: output, shape index: {1}]
  %s19 = inlined_call_operand.hbm [shape: f32[3,4,128], index: 19, kind: output, shape index: {2}]
  %s20 = inlined_call_operand.hbm [shape: f32[4,128], index: 20, kind: output, shape index: {3}]
  %21 = xla_tuple %s17, %s18, %s19, %s20
  %s22 = sld [smem:[#allocation0]]
  $region102: #{tpu_custom_call.1} parent=0
    _
  %s24 = ssub.s32 1, %s22
  %s25 = scalar_select 0, %s24, %s22
  $region1: #{tpu_custom_call.1} parent=0
    #allocation2 [shape = 'u8[6144]{0}', space=vmem, size = 0x1800, scoped, tag = 'output window, operand 0, single buffered']
    #allocation3 [shape = 's32[1]{0}', space=sflag, size = 0x4, scoped, tag = 'scoped memory for tpu_custom_call.1']
    #allocation4 [shape = 'u8[6144]{0}', space=vmem, size = 0x1800, scoped, tag = 'output window, operand 1, single buffered']
    #allocation5 [shape = 's32[1]{0}', space=sflag, size = 0x4, scoped, tag = 'scoped memory for tpu_custom_call.1']
    #allocation6 [shape = 'u8[6144]{0}', space=vmem, size = 0x1800, scoped, tag = 'output window, operand 2, single buffered']
    #allocation7 [shape = 'u8[2048]{0}', space=vmem, size = 0x800, scoped, tag = 'output window, operand 3, single buffered']
    #allocation8 [shape = 's32[1]{0}', space=sflag, size = 0x4, scoped, tag = 'scoped memory for tpu_custom_call.1']
    %26 = vsyncpa [#allocation3], 0
    %27 = vsyncpa [#allocation5], 0
    %28 = vsyncpa [#allocation8], 0
    // Predicated region
    $region2: #{tpu_custom_call.1} parent=1 // pred_check
      _
    $region3: #{tpu_custom_call.1} parent=1 // pred_check_branch
      %30 = sbr.rel (0) target = $region5
    $region4: #{tpu_custom_call.1} parent=1 // pred_region
      _
    $region5: #{tpu_custom_call.1} parent=1 // pred_fallthru
      _
    // Predicated region
    $region6: #{tpu_custom_call.1} parent=1 // pred_check
      _
    $region7: #{tpu_custom_call.1} parent=1 // pred_check_branch
      %32 = sbr.rel (0) target = $region9
    $region8: #{tpu_custom_call.1} parent=1 // pred_region
      _
    $region9: #{tpu_custom_call.1} parent=1 // pred_fallthru
      _
    // Predicated region
    $region10: #{tpu_custom_call.1} parent=1 // pred_check
      _
    $region11: #{tpu_custom_call.1} parent=1 // pred_check_branch
      %34 = sbr.rel (0) target = $region13
    $region12: #{tpu_custom_call.1} parent=1 // pred_region
      _
    $region13: #{tpu_custom_call.1} parent=1 // pred_fallthru
      _
    // Predicated region
    $region14: #{tpu_custom_call.1} parent=1 // pred_check
      _
    $region15: #{tpu_custom_call.1} parent=1 // pred_check_branch
      %36 = sbr.rel (0) target = $region17
    $region16: #{tpu_custom_call.1} parent=1 // pred_region
      _
    $region17: #{tpu_custom_call.1} parent=1 // pred_fallthru
      _
    // Predicated region
    $region18: #{tpu_custom_call.1} parent=1 // pred_check
      _
    $region19: #{tpu_custom_call.1} parent=1 // pred_check_branch
      %38 = sbr.rel (0) target = $region21
    $region20: #{tpu_custom_call.1} parent=1 // pred_region
      _
    $region21: #{tpu_custom_call.1} parent=1 // pred_fallthru
      _
    // Predicated region
    $region22: #{tpu_custom_call.1} parent=1 // pred_check
      _
    $region23: #{tpu_custom_call.1} parent=1 // pred_check_branch
      %40 = sbr.rel (0) target = $region25
    $region24: #{tpu_custom_call.1} parent=1 // pred_region
      _
    $region25: #{tpu_custom_call.1} parent=1 // pred_fallthru
      _
    // Predicated region
    $region26: #{tpu_custom_call.1} parent=1 // pred_check
      _
    $region27: #{tpu_custom_call.1} parent=1 // pred_check_branch
      %42 = sbr.rel (0) target = $region29
    $region28: #{tpu_custom_call.1} parent=1 // pred_region
      _
    $region29: #{tpu_custom_call.1} parent=1 // pred_fallthru
      _
    // Predicated region
    $region30: #{tpu_custom_call.1} parent=1 // pred_check
      _
    $region31: #{tpu_custom_call.1} parent=1 // pred_check_branch
      %44 = sbr.rel (0) target = $region33
    $region32: #{tpu_custom_call.1} parent=1 // pred_region
      _
    $region33: #{tpu_custom_call.1} parent=1 // pred_fallthru
      _
    // Predicated region
    $region34: #{tpu_custom_call.1} parent=1 // pred_check
      _
    $region35: #{tpu_custom_call.1} parent=1 // pred_check_branch
      %46 = sbr.rel (0) target = $region37
    $region36: #{tpu_custom_call.1} parent=1 // pred_region
      _
    $region37: #{tpu_custom_call.1} parent=1 // pred_fallthru
      _
    // Predicated region
    $region38: #{tpu_custom_call.1} parent=1 // pred_check
      _
    $region39: #{tpu_custom_call.1} parent=1 // pred_check_branch
      %48 = sbr.rel (0) target = $region41
    $region40: #{tpu_custom_call.1} parent=1 // pred_region
      _
    $region41: #{tpu_custom_call.1} parent=1 // pred_fallthru
      _
    // Predicated region
    $region42: #{tpu_custom_call.1} parent=1 // pred_check
      _
    $region43: #{tpu_custom_call.1} parent=1 // pred_check_branch
      %50 = sbr.rel (0) target = $region45
    $region44: #{tpu_custom_call.1} parent=1 // pred_region
      _
    $region45: #{tpu_custom_call.1} parent=1 // pred_fallthru
      _
    // Predicated region
    $region46: #{tpu_custom_call.1} parent=1 // pred_check
      _
    $region47: #{tpu_custom_call.1} parent=1 // pred_check_branch
      %52 = sbr.rel (0) target = $region49
    $region48: #{tpu_custom_call.1} parent=1 // pred_region
      _
    $region49: #{tpu_custom_call.1} parent=1 // pred_fallthru
      _
    // Predicated region
    $region50: #{tpu_custom_call.1} parent=1 // pred_check
      _
    $region51: #{tpu_custom_call.1} parent=1 // pred_check_branch
      %54 = sbr.rel (0) target = $region53
    $region52: #{tpu_custom_call.1} parent=1 // pred_region
      _
    $region53: #{tpu_custom_call.1} parent=1 // pred_fallthru
      _
    // Predicated region
    $region54: #{tpu_custom_call.1} parent=1 // pred_check
      _
    $region55: #{tpu_custom_call.1} parent=1 // pred_check_branch
      %56 = sbr.rel (0) target = $region57
    $region56: #{tpu_custom_call.1} parent=1 // pred_region
      _
    $region57: #{tpu_custom_call.1} parent=1 // pred_fallthru
      _
    // Predicated region
    $region58: #{tpu_custom_call.1} parent=1 // pred_check
      _
    $region59: #{tpu_custom_call.1} parent=1 // pred_check_branch
      %58 = sbr.rel (0) target = $region61
    $region60: #{tpu_custom_call.1} parent=1 // pred_region
      _
    $region61: #{tpu_custom_call.1} parent=1 // pred_fallthru
      _
    // Predicated region
    $region62: #{tpu_custom_call.1} parent=1 // pred_check
      _
    $region63: #{tpu_custom_call.1} parent=1 // pred_check_branch
      %60 = sbr.rel (0) target = $region65
    $region64: #{tpu_custom_call.1} parent=1 // pred_region
      _
    $region65: #{tpu_custom_call.1} parent=1 // pred_fallthru
      _
    // Predicated region
    $region66: #{tpu_custom_call.1} parent=1 // pred_check
      _
    $region67: #{tpu_custom_call.1} parent=1 // pred_check_branch
      %62 = sbr.rel (0) target = $region69
    $region68: #{tpu_custom_call.1} parent=1 // pred_region
      _
    $region69: #{tpu_custom_call.1} parent=1 // pred_fallthru
      _
    %v63 = vld [vmem:[%s0] sm:$0xff]
    %v64 = vld [vmem:[%s0 + $0x8] sm:$0xff]
    %v65 = vld [vmem:[%s1] sm:$0xff]
    %s66 = scalar_lea.vmem %s1, 8
    %v67 = vld [vmem:[%s66] sm:$0xff]
    %s68 = scalar_lea.vmem %s1, 16
    %v69 = vld [vmem:[%s68] sm:$0xff]
    %v70 = vld [vmem:[%s3] sm:$0xff]
    %v71 = vld [vmem:[%s3 + $0x8] sm:$0xff]
    %v72 = vld [vmem:[%s4] sm:$0xff]
    %v73 = vld [vmem:[%s4 + $0x8] sm:$0xff]
    %v74 = vld [vmem:[%s5] sm:$0xff]
    %v75 = vld [vmem:[%s5 + $0x8] sm:$0xff]
    %v76 = vld [vmem:[%s5 + $0x10] sm:$0xff]
    %v77 = vld [vmem:[%s5 + $0x18] sm:$0xff]
    %v78 = vld [vmem:[%s6] sm:$0xff]
    %v79 = vld [vmem:[%s6 + $0x8] sm:$0xff]
    %v80 = vld [vmem:[%s6 + $0x10] sm:$0xff]
    %v81 = vld [vmem:[%s6 + $0x18] sm:$0xff]
    %vm82 = vcmask 64512
    %v84 = vsel %vm82, %v70, 0
    %v87 = vsel %vm82, %v71, 0
    %89 = vmatprep.subr.mxu0 %v67
    %90 = vmatpush1.msra.mxu0 %v65
    %91 = vmatprep.subr.mxu0 0.0
    %92 = vmatpush1.msra.mxu0 0.0
    %93 = vmatprep.subr.mxu0 0.0
    %94 = vmatpush1.msra.mxu0 0.0
    %95 = vmatprep.subr.mxu0 0.0
    %96 = vmatpush1.msra.mxu0 0.0
    %97 = vmatprep.subr.mxu0 0.0
    %98 = vmatpush1.msra.mxu0 0.0
    %99 = vmatprep.subr.mxu0 0.0
    %100 = vmatpush1.msra.mxu0 0.0
    %101 = vmatprep.subr.mxu0 0.0
    %102 = vmatpush1.msra.mxu0 0.0
    %103 = vmatprep.subr.mxu0 0.0
    %104 = vmatpush1.msra.mxu0 0.0
    %105 = vmatprep.subr.mxu0 0.0
    %106 = vmatpush1.msra.mxu0 0.0
    %107 = vmatprep.subr.mxu0 0.0
    %108 = vmatpush1.msra.mxu0 0.0
    %109 = vmatprep.subr.mxu0 0.0
    %110 = vmatpush1.msra.mxu0 0.0
    %111 = vmatprep.subr.mxu0 0.0
    %112 = vmatpush1.msra.mxu0 0.0
    %113 = vmatprep.subr.mxu0 0.0
    %114 = vmatpush1.msra.mxu0 0.0
    %115 = vmatprep.subr.mxu0 0.0
    %116 = vmatpush1.msra.mxu0 0.0
    %117 = vmatprep.subr.mxu0 0.0
    %118 = vmatpush1.msra.mxu0 0.0
    %119 = vmatprep.subr.mxu0 0.0
    %120 = vmatpush1.msra.mxu0 0.0
    %121 = vmatprep.subr.mxu0 0.0
    %122 = vmatpush1.msra.mxu0 0.0
    %123 = vmatprep.subr.mxu0 0.0
    %124 = vmatpush1.msra.mxu0 0.0
    %125 = vmatprep.subr.mxu0 0.0
    %126 = vmatpush1.msra.mxu0 0.0
    %127 = vmatprep.subr.mxu0 0.0
    %128 = vmatpush1.msra.mxu0 0.0
    %129 = vmatprep.subr.mxu0 0.0
    %130 = vmatpush1.msra.mxu0 0.0
    %131 = vmatprep.subr.mxu0 0.0
    %132 = vmatpush1.msra.mxu0 0.0
    %133 = vmatprep.subr.mxu0 0.0
    %134 = vmatpush1.msra.mxu0 0.0
    %135 = vmatprep.subr.mxu0 0.0
    %136 = vmatpush1.msra.mxu0 0.0
    %137 = vmatprep.subr.mxu0 0.0
    %138 = vmatpush1.msra.mxu0 0.0
    %139 = vmatprep.subr.mxu0 0.0
    %140 = vmatpush1.msra.mxu0 0.0
    %141 = vmatprep.subr.mxu0 0.0
    %142 = vmatpush1.msra.mxu0 0.0
    %143 = vmatprep.subr.mxu0 0.0
    %144 = vmatpush1.msra.mxu0 0.0
    %145 = vmatprep.subr.mxu0 0.0
    %146 = vmatpush1.msra.mxu0 0.0
    %147 = vmatprep.subr.mxu0 0.0
    %148 = vmatpush1.msra.mxu0 0.0
    %149 = vmatprep.subr.mxu0 0.0
    %150 = vmatpush1.msra.mxu0 0.0
    %151 = vmatprep.subr.mxu0 0.0
    %152 = vmatpush1.msra.mxu0 0.0
    %153 = vmatprep.mubr.f32.mxu0 0.0
    %154 = vmatmul.mubr.f32.gmra.mrb[0].mxu0 %v84
    %v155 = vpop.f32.mrb[0].mxu0
    %v156 = vadd.f32 0.0, %v155
    %v157 = vpop.f32.mrb[0].mxu0
    %v158 = vadd.f32 0.0, %v157
    %159 = vmatprep.mubr.f32.mxu0 0.0
    %160 = vmatmul.mubr.f32.gmra.mrb[0].mxu0 %v87
    %v161 = vpop.f32.mrb[0].mxu0
    %v162 = vadd.f32 0.0, %v161
    %v163 = vpop.f32.mrb[0].mxu0
    %v164 = vadd.f32 0.0, %v163
    %165 = vdwg.mxu0
    %166 = vmatprep.subr.mxu0 0.0
    %167 = vmatpush1.msra.mxu0 %v69
    %168 = vmatprep.subr.mxu0 0.0
    %169 = vmatpush1.msra.mxu0 0.0
    %170 = vmatprep.subr.mxu0 0.0
    %171 = vmatpush1.msra.mxu0 0.0
    %172 = vmatprep.subr.mxu0 0.0
    %173 = vmatpush1.msra.mxu0 0.0
    %174 = vmatprep.subr.mxu0 0.0
    %175 = vmatpush1.msra.mxu0 0.0
    %176 = vmatprep.subr.mxu0 0.0
    %177 = vmatpush1.msra.mxu0 0.0
    %178 = vmatprep.subr.mxu0 0.0
    %179 = vmatpush1.msra.mxu0 0.0
    %180 = vmatprep.subr.mxu0 0.0
    %181 = vmatpush1.msra.mxu0 0.0
    %182 = vmatprep.subr.mxu0 0.0
    %183 = vmatpush1.msra.mxu0 0.0
    %184 = vmatprep.subr.mxu0 0.0
    %185 = vmatpush1.msra.mxu0 0.0
    %186 = vmatprep.subr.mxu0 0.0
    %187 = vmatpush1.msra.mxu0 0.0
    %188 = vmatprep.subr.mxu0 0.0
    %189 = vmatpush1.msra.mxu0 0.0
    %190 = vmatprep.subr.mxu0 0.0
    %191 = vmatpush1.msra.mxu0 0.0
    %192 = vmatprep.subr.mxu0 0.0
    %193 = vmatpush1.msra.mxu0 0.0
    %194 = vmatprep.subr.mxu0 0.0
    %195 = vmatpush1.msra.mxu0 0.0
    %196 = vmatprep.subr.mxu0 0.0
    %197 = vmatpush1.msra.mxu0 0.0
    %198 = vmatprep.subr.mxu0 0.0
    %199 = vmatpush1.msra.mxu0 0.0
    %200 = vmatprep.subr.mxu0 0.0
    %201 = vmatpush1.msra.mxu0 0.0
    %202 = vmatprep.subr.mxu0 0.0
    %203 = vmatpush1.msra.mxu0 0.0
    %204 = vmatprep.subr.mxu0 0.0
    %205 = vmatpush1.msra.mxu0 0.0
    %206 = vmatprep.subr.mxu0 0.0
    %207 = vmatpush1.msra.mxu0 0.0
    %208 = vmatprep.subr.mxu0 0.0
    %209 = vmatpush1.msra.mxu0 0.0
    %210 = vmatprep.subr.mxu0 0.0
    %211 = vmatpush1.msra.mxu0 0.0
    %212 = vmatprep.subr.mxu0 0.0
    %213 = vmatpush1.msra.mxu0 0.0
    %214 = vmatprep.subr.mxu0 0.0
    %215 = vmatpush1.msra.mxu0 0.0
    %216 = vmatprep.subr.mxu0 0.0
    %217 = vmatpush1.msra.mxu0 0.0
    %218 = vmatprep.subr.mxu0 0.0
    %219 = vmatpush1.msra.mxu0 0.0
    %220 = vmatprep.subr.mxu0 0.0
    %221 = vmatpush1.msra.mxu0 0.0
    %222 = vmatprep.subr.mxu0 0.0
    %223 = vmatpush1.msra.mxu0 0.0
    %224 = vmatprep.subr.mxu0 0.0
    %225 = vmatpush1.msra.mxu0 0.0
    %226 = vmatprep.subr.mxu0 0.0
    %227 = vmatpush1.msra.mxu0 0.0
    %228 = vmatprep.subr.mxu0 0.0
    %229 = vmatpush1.msra.mxu0 0.0
    %230 = vmatprep.mubr.f32.mxu0 0.0
    %231 = vmatmul.mubr.f32.gmra.mrb[0].mxu0 %v84
    %v232 = vpop.f32.mrb[0].mxu0
    %v233 = vadd.f32 0.0, %v232
    %v234 = vpop.f32.mrb[0].mxu0
    %235 = vmatprep.mubr.f32.mxu0 0.0
    %236 = vmatmul.mubr.f32.gmra.mrb[0].mxu0 %v87
    %v237 = vpop.f32.mrb[0].mxu0
    %v238 = vadd.f32 0.0, %v237
    %v239 = vpop.f32.mrb[0].mxu0
    %240 = vdwg.mxu0
    %v241 = vmul.f32 %v156, %v156
    %v242 = vmul.f32 %v162, %v162
    %v243 = vmul.f32 %v158, %v158
    %v244 = vmul.f32 %v164, %v164
    %v245 = vadd.f32 %v241, %v243
    %v246 = vadd.f32 %v242, %v244
    %v247 = vmul.f32 %v233, %v233
    %v248 = vmul.f32 %v238, %v238
    %v249 = vadd.f32 %v245, %v247
    %v250 = vadd.f32 %v246, %v248
    %v251 = vrsqrt.pop %v249
    %v252 = vmul.f32 %v249, %v251
    %vm253 = vcmp.eq.f32.partialorder %v249, inf
    %v254 = vsel %vm253, %v249, %v252
    %vm255 = vcmp.eq.f32.partialorder %v249, 0.0
    %v256 = vand.u32 %v249, 2147483648
    %v257 = vsel %vm255, %v256, %v254
    %v258 = vrsqrt.pop %v250
    %v259 = vmul.f32 %v250, %v258
    %vm260 = vcmp.eq.f32.partialorder %v250, inf
    %v261 = vsel %vm260, %v250, %v259
    %vm262 = vcmp.eq.f32.partialorder %v250, 0.0
    %v263 = vand.u32 %v250, 2147483648
    %v264 = vsel %vm262, %v263, %v261
    %vm265 = vcmask 130048
    %v267 = vsel %vm265, %v78, 0
    %v270 = vsel %vm265, %v79, 0
    %v273 = vsel %vm265, %v80, 0
    %v276 = vsel %vm265, %v81, 0
    %278 = vmatprep.subr.mxu0 0.0
    %279 = vmatpush1.msra.mxu0 %v63
    %280 = vmatprep.subr.mxu0 0.0
    %281 = vmatpush1.msra.mxu0 %v64
    %282 = vmatprep.subr.mxu0 0.0
    %283 = vmatpush1.msra.mxu0 0.0
    %284 = vmatprep.subr.mxu0 0.0
    %285 = vmatpush1.msra.mxu0 0.0
    %286 = vmatprep.subr.mxu0 0.0
    %287 = vmatpush1.msra.mxu0 0.0
    %288 = vmatprep.subr.mxu0 0.0
    %289 = vmatpush1.msra.mxu0 0.0
    %290 = vmatprep.subr.mxu0 0.0
    %291 = vmatpush1.msra.mxu0 0.0
    %292 = vmatprep.subr.mxu0 0.0
    %293 = vmatpush1.msra.mxu0 0.0
    %294 = vmatprep.subr.mxu0 0.0
    %295 = vmatpush1.msra.mxu0 0.0
    %296 = vmatprep.subr.mxu0 0.0
    %297 = vmatpush1.msra.mxu0 0.0
    %298 = vmatprep.subr.mxu0 0.0
    %299 = vmatpush1.msra.mxu0 0.0
    %300 = vmatprep.subr.mxu0 0.0
    %301 = vmatpush1.msra.mxu0 0.0
    %302 = vmatprep.subr.mxu0 0.0
    %303 = vmatpush1.msra.mxu0 0.0
    %304 = vmatprep.subr.mxu0 0.0
    %305 = vmatpush1.msra.mxu0 0.0
    %306 = vmatprep.subr.mxu0 0.0
    %307 = vmatpush1.msra.mxu0 0.0
    %308 = vmatprep.subr.mxu0 0.0
    %309 = vmatpush1.msra.mxu0 0.0
    %310 = vmatprep.subr.mxu0 0.0
    %311 = vmatpush1.msra.mxu0 0.0
    %312 = vmatprep.subr.mxu0 0.0
    %313 = vmatpush1.msra.mxu0 0.0
    %314 = vmatprep.subr.mxu0 0.0
    %315 = vmatpush1.msra.mxu0 0.0
    %316 = vmatprep.subr.mxu0 0.0
    %317 = vmatpush1.msra.mxu0 0.0
    %318 = vmatprep.subr.mxu0 0.0
    %319 = vmatpush1.msra.mxu0 0.0
    %320 = vmatprep.subr.mxu0 0.0
    %321 = vmatpush1.msra.mxu0 0.0
    %322 = vmatprep.subr.mxu0 0.0
    %323 = vmatpush1.msra.mxu0 0.0
    %324 = vmatprep.subr.mxu0 0.0
    %325 = vmatpush1.msra.mxu0 0.0
    %326 = vmatprep.subr.mxu0 0.0
    %327 = vmatpush1.msra.mxu0 0.0
    %328 = vmatprep.subr.mxu0 0.0
    %329 = vmatpush1.msra.mxu0 0.0
    %330 = vmatprep.subr.mxu0 0.0
    %331 = vmatpush1.msra.mxu0 0.0
    %332 = vmatprep.subr.mxu0 0.0
    %333 = vmatpush1.msra.mxu0 0.0
    %334 = vmatprep.subr.mxu0 0.0
    %335 = vmatpush1.msra.mxu0 0.0
    %336 = vmatprep.subr.mxu0 0.0
    %337 = vmatpush1.msra.mxu0 0.0
    %338 = vmatprep.subr.mxu0 0.0
    %339 = vmatpush1.msra.mxu0 0.0
    %340 = vmatprep.subr.mxu0 0.0
    %341 = vmatpush1.msra.mxu0 0.0
    %342 = vmatprep.mubr.f32.mxu0 0.0
    %343 = vmatmul.mubr.f32.gmra.mrb[0].mxu0 %v267
    %v344 = vpop.f32.mrb[0].mxu0
    %v345 = vadd.f32 0.0, %v344
    %v346 = vpop.f32.mrb[0].mxu0
    %347 = vmatprep.mubr.f32.mxu0 0.0
    %348 = vmatmul.mubr.f32.gmra.mrb[0].mxu0 %v270
    %v349 = vpop.f32.mrb[0].mxu0
    %v350 = vadd.f32 0.0, %v349
    %v351 = vpop.f32.mrb[0].mxu0
    %352 = vmatprep.mubr.f32.mxu0 0.0
    %353 = vmatmul.mubr.f32.gmra.mrb[0].mxu0 %v273
    %v354 = vpop.f32.mrb[0].mxu0
    %v355 = vadd.f32 0.0, %v354
    %v356 = vpop.f32.mrb[0].mxu0
    %357 = vmatprep.mubr.f32.mxu0 0.0
    %358 = vmatmul.mubr.f32.gmra.mrb[0].mxu0 %v276
    %v359 = vpop.f32.mrb[0].mxu0
    %v360 = vadd.f32 0.0, %v359
    %v361 = vpop.f32.mrb[0].mxu0
    %362 = vdwg.mxu0
    %v364 = vsel %vm265, %v74, 0
    %v367 = vsel %vm265, %v75, 0
    %v370 = vsel %vm265, %v76, 0
    %v373 = vsel %vm265, %v77, 0
    %375 = vmatprep.subr.mxu0 0.0
    %376 = vmatpush1.msra.mxu0 %v257
    %377 = vmatprep.subr.mxu0 0.0
    %378 = vmatpush1.msra.mxu0 %v264
    %379 = vmatprep.subr.mxu0 0.0
    %380 = vmatpush1.msra.mxu0 0.0
    %381 = vmatprep.subr.mxu0 0.0
    %382 = vmatpush1.msra.mxu0 0.0
    %383 = vmatprep.subr.mxu0 0.0
    %384 = vmatpush1.msra.mxu0 0.0
    %385 = vmatprep.subr.mxu0 0.0
    %386 = vmatpush1.msra.mxu0 0.0
    %387 = vmatprep.subr.mxu0 0.0
    %388 = vmatpush1.msra.mxu0 0.0
    %389 = vmatprep.subr.mxu0 0.0
    %390 = vmatpush1.msra.mxu0 0.0
    %391 = vmatprep.subr.mxu0 0.0
    %392 = vmatpush1.msra.mxu0 0.0
    %393 = vmatprep.subr.mxu0 0.0
    %394 = vmatpush1.msra.mxu0 0.0
    %395 = vmatprep.subr.mxu0 0.0
    %396 = vmatpush1.msra.mxu0 0.0
    %397 = vmatprep.subr.mxu0 0.0
    %398 = vmatpush1.msra.mxu0 0.0
    %399 = vmatprep.subr.mxu0 0.0
    %400 = vmatpush1.msra.mxu0 0.0
    %401 = vmatprep.subr.mxu0 0.0
    %402 = vmatpush1.msra.mxu0 0.0
    %403 = vmatprep.subr.mxu0 0.0
    %404 = vmatpush1.msra.mxu0 0.0
    %405 = vmatprep.subr.mxu0 0.0
    %406 = vmatpush1.msra.mxu0 0.0
    %407 = vmatprep.subr.mxu0 0.0
    %408 = vmatpush1.msra.mxu0 0.0
    %409 = vmatprep.subr.mxu0 0.0
    %410 = vmatpush1.msra.mxu0 0.0
    %411 = vmatprep.subr.mxu0 0.0
    %412 = vmatpush1.msra.mxu0 0.0
    %413 = vmatprep.subr.mxu0 0.0
    %414 = vmatpush1.msra.mxu0 0.0
    %415 = vmatprep.subr.mxu0 0.0
    %416 = vmatpush1.msra.mxu0 0.0
    %417 = vmatprep.subr.mxu0 0.0
    %418 = vmatpush1.msra.mxu0 0.0
    %419 = vmatprep.subr.mxu0 0.0
    %420 = vmatpush1.msra.mxu0 0.0
    %421 = vmatprep.subr.mxu0 0.0
    %422 = vmatpush1.msra.mxu0 0.0
    %423 = vmatprep.subr.mxu0 0.0
    %424 = vmatpush1.msra.mxu0 0.0
    %425 = vmatprep.subr.mxu0 0.0
    %426 = vmatpush1.msra.mxu0 0.0
    %427 = vmatprep.subr.mxu0 0.0
    %428 = vmatpush1.msra.mxu0 0.0
    %429 = vmatprep.subr.mxu0 0.0
    %430 = vmatpush1.msra.mxu0 0.0
    %431 = vmatprep.subr.mxu0 0.0
    %432 = vmatpush1.msra.mxu0 0.0
    %433 = vmatprep.subr.mxu0 0.0
    %434 = vmatpush1.msra.mxu0 0.0
    %435 = vmatprep.subr.mxu0 0.0
    %436 = vmatpush1.msra.mxu0 0.0
    %437 = vmatprep.subr.mxu0 0.0
    %438 = vmatpush1.msra.mxu0 0.0
    %439 = vmatprep.mubr.f32.mxu0 0.0
    %440 = vmatmul.mubr.f32.gmra.mrb[0].mxu0 %v364
    %v441 = vpop.f32.mrb[0].mxu0
    %v442 = vadd.f32 %v345, %v441
    %v443 = vpop.f32.mrb[0].mxu0
    %444 = vmatprep.mubr.f32.mxu0 0.0
    %445 = vmatmul.mubr.f32.gmra.mrb[0].mxu0 %v367
    %v446 = vpop.f32.mrb[0].mxu0
    %v447 = vadd.f32 %v350, %v446
    %v448 = vpop.f32.mrb[0].mxu0
    %449 = vmatprep.mubr.f32.mxu0 0.0
    %450 = vmatmul.mubr.f32.gmra.mrb[0].mxu0 %v370
    %v451 = vpop.f32.mrb[0].mxu0
    %v452 = vadd.f32 %v355, %v451
    %v453 = vpop.f32.mrb[0].mxu0
    %454 = vmatprep.mubr.f32.mxu0 0.0
    %455 = vmatmul.mubr.f32.gmra.mrb[0].mxu0 %v373
    %v456 = vpop.f32.mrb[0].mxu0
    %v457 = vadd.f32 %v360, %v456
    %v458 = vpop.f32.mrb[0].mxu0
    %459 = vdwg.mxu0
    %v461 = vsel %vm265, %v72, 0
    %v464 = vsel %vm265, %v73, 0
    %466 = vmatprep.subr.mxu0 %v158
    %467 = vmatpush1.msra.mxu0 %v156
    %468 = vmatprep.subr.mxu0 %v164
    %469 = vmatpush1.msra.mxu0 %v162
    %470 = vmatprep.subr.mxu0 0.0
    %471 = vmatpush1.msra.mxu0 0.0
    %472 = vmatprep.subr.mxu0 0.0
    %473 = vmatpush1.msra.mxu0 0.0
    %474 = vmatprep.subr.mxu0 0.0
    %475 = vmatpush1.msra.mxu0 0.0
    %476 = vmatprep.subr.mxu0 0.0
    %477 = vmatpush1.msra.mxu0 0.0
    %478 = vmatprep.subr.mxu0 0.0
    %479 = vmatpush1.msra.mxu0 0.0
    %480 = vmatprep.subr.mxu0 0.0
    %481 = vmatpush1.msra.mxu0 0.0
    %482 = vmatprep.subr.mxu0 0.0
    %483 = vmatpush1.msra.mxu0 0.0
    %484 = vmatprep.subr.mxu0 0.0
    %485 = vmatpush1.msra.mxu0 0.0
    %486 = vmatprep.subr.mxu0 0.0
    %487 = vmatpush1.msra.mxu0 0.0
    %488 = vmatprep.subr.mxu0 0.0
    %489 = vmatpush1.msra.mxu0 0.0
    %490 = vmatprep.subr.mxu0 0.0
    %491 = vmatpush1.msra.mxu0 0.0
    %492 = vmatprep.subr.mxu0 0.0
    %493 = vmatpush1.msra.mxu0 0.0
    %494 = vmatprep.subr.mxu0 0.0
    %495 = vmatpush1.msra.mxu0 0.0
    %496 = vmatprep.subr.mxu0 0.0
    %497 = vmatpush1.msra.mxu0 0.0
    %498 = vmatprep.subr.mxu0 0.0
    %499 = vmatpush1.msra.mxu0 0.0
    %500 = vmatprep.subr.mxu0 0.0
    %501 = vmatpush1.msra.mxu0 0.0
    %502 = vmatprep.subr.mxu0 0.0
    %503 = vmatpush1.msra.mxu0 0.0
    %504 = vmatprep.subr.mxu0 0.0
    %505 = vmatpush1.msra.mxu0 0.0
    %506 = vmatprep.subr.mxu0 0.0
    %507 = vmatpush1.msra.mxu0 0.0
    %508 = vmatprep.subr.mxu0 0.0
    %509 = vmatpush1.msra.mxu0 0.0
    %510 = vmatprep.subr.mxu0 0.0
    %511 = vmatpush1.msra.mxu0 0.0
    %512 = vmatprep.subr.mxu0 0.0
    %513 = vmatpush1.msra.mxu0 0.0
    %514 = vmatprep.subr.mxu0 0.0
    %515 = vmatpush1.msra.mxu0 0.0
    %516 = vmatprep.subr.mxu0 0.0
    %517 = vmatpush1.msra.mxu0 0.0
    %518 = vmatprep.subr.mxu0 0.0
    %519 = vmatpush1.msra.mxu0 0.0
    %520 = vmatprep.subr.mxu0 0.0
    %521 = vmatpush1.msra.mxu0 0.0
    %522 = vmatprep.subr.mxu0 0.0
    %523 = vmatpush1.msra.mxu0 0.0
    %524 = vmatprep.subr.mxu0 0.0
    %525 = vmatpush1.msra.mxu0 0.0
    %526 = vmatprep.subr.mxu0 0.0
    %527 = vmatpush1.msra.mxu0 0.0
    %528 = vmatprep.subr.mxu0 0.0
    %529 = vmatpush1.msra.mxu0 0.0
    %530 = vmatprep.mubr.f32.mxu0 0.0
    %531 = vmatmul.mubr.f32.gmra.mrb[0].mxu0 %v461
    %v532 = vpop.f32.mrb[0].mxu0
    %v533 = vadd.f32 0.0, %v532
    %v534 = vpop.f32.mrb[0].mxu0
    %v535 = vadd.f32 0.0, %v534
    %536 = vmatprep.mubr.f32.mxu0 0.0
    %537 = vmatmul.mubr.f32.gmra.mrb[0].mxu0 %v464
    %v538 = vpop.f32.mrb[0].mxu0
    %v539 = vadd.f32 0.0, %v538
    %v540 = vpop.f32.mrb[0].mxu0
    %v541 = vadd.f32 0.0, %v540
    %542 = vdwg.mxu0
    %543 = vmatprep.subr.mxu0 0.0
    %544 = vmatpush1.msra.mxu0 %v233
    %545 = vmatprep.subr.mxu0 0.0
    %546 = vmatpush1.msra.mxu0 %v238
    %547 = vmatprep.subr.mxu0 0.0
    %548 = vmatpush1.msra.mxu0 0.0
    %549 = vmatprep.subr.mxu0 0.0
    %550 = vmatpush1.msra.mxu0 0.0
    %551 = vmatprep.subr.mxu0 0.0
    %552 = vmatpush1.msra.mxu0 0.0
    %553 = vmatprep.subr.mxu0 0.0
    %554 = vmatpush1.msra.mxu0 0.0
    %555 = vmatprep.subr.mxu0 0.0
    %556 = vmatpush1.msra.mxu0 0.0
    %557 = vmatprep.subr.mxu0 0.0
    %558 = vmatpush1.msra.mxu0 0.0
    %559 = vmatprep.subr.mxu0 0.0
    %560 = vmatpush1.msra.mxu0 0.0
    %561 = vmatprep.subr.mxu0 0.0
    %562 = vmatpush1.msra.mxu0 0.0
    %563 = vmatprep.subr.mxu0 0.0
    %564 = vmatpush1.msra.mxu0 0.0
    %565 = vmatprep.subr.mxu0 0.0
    %566 = vmatpush1.msra.mxu0 0.0
    %567 = vmatprep.subr.mxu0 0.0
    %568 = vmatpush1.msra.mxu0 0.0
    %569 = vmatprep.subr.mxu0 0.0
    %570 = vmatpush1.msra.mxu0 0.0
    %571 = vmatprep.subr.mxu0 0.0
    %572 = vmatpush1.msra.mxu0 0.0
    %573 = vmatprep.subr.mxu0 0.0
    %574 = vmatpush1.msra.mxu0 0.0
    %575 = vmatprep.subr.mxu0 0.0
    %576 = vmatpush1.msra.mxu0 0.0
    %577 = vmatprep.subr.mxu0 0.0
    %578 = vmatpush1.msra.mxu0 0.0
    %579 = vmatprep.subr.mxu0 0.0
    %580 = vmatpush1.msra.mxu0 0.0
    %581 = vmatprep.subr.mxu0 0.0
    %582 = vmatpush1.msra.mxu0 0.0
    %583 = vmatprep.subr.mxu0 0.0
    %584 = vmatpush1.msra.mxu0 0.0
    %585 = vmatprep.subr.mxu0 0.0
    %586 = vmatpush1.msra.mxu0 0.0
    %587 = vmatprep.subr.mxu0 0.0
    %588 = vmatpush1.msra.mxu0 0.0
    %589 = vmatprep.subr.mxu0 0.0
    %590 = vmatpush1.msra.mxu0 0.0
    %591 = vmatprep.subr.mxu0 0.0
    %592 = vmatpush1.msra.mxu0 0.0
    %593 = vmatprep.subr.mxu0 0.0
    %594 = vmatpush1.msra.mxu0 0.0
    %595 = vmatprep.subr.mxu0 0.0
    %596 = vmatpush1.msra.mxu0 0.0
    %597 = vmatprep.subr.mxu0 0.0
    %598 = vmatpush1.msra.mxu0 0.0
    %599 = vmatprep.subr.mxu0 0.0
    %600 = vmatpush1.msra.mxu0 0.0
    %601 = vmatprep.subr.mxu0 0.0
    %602 = vmatpush1.msra.mxu0 0.0
    %603 = vmatprep.subr.mxu0 0.0
    %604 = vmatpush1.msra.mxu0 0.0
    %605 = vmatprep.subr.mxu0 0.0
    %606 = vmatpush1.msra.mxu0 0.0
    %607 = vmatprep.mubr.f32.mxu0 0.0
    %608 = vmatmul.mubr.f32.gmra.mrb[0].mxu0 %v461
    %v609 = vpop.f32.mrb[0].mxu0
    %v610 = vadd.f32 0.0, %v609
    %v611 = vpop.f32.mrb[0].mxu0
    %612 = vmatprep.mubr.f32.mxu0 0.0
    %613 = vmatmul.mubr.f32.gmra.mrb[0].mxu0 %v464
    %v614 = vpop.f32.mrb[0].mxu0
    %v615 = vadd.f32 0.0, %v614
    %v616 = vpop.f32.mrb[0].mxu0
    %617 = vdwg.mxu0
    %v618 = vld [vmem:[%s7] sm:$0xff]
    %v619 = vld [vmem:[%s7 + $0x8] sm:$0xff]
    %v621 = vsel %vm265, %v618, 0
    %v624 = vsel %vm265, %v619, 0
    %626 = vmatprep.subr.mxu0 %v535
    %627 = vmatpush1.msra.mxu0 %v533
    %628 = vmatprep.subr.mxu0 %v541
    %629 = vmatpush1.msra.mxu0 %v539
    %630 = vmatprep.subr.mxu0 0.0
    %631 = vmatpush1.msra.mxu0 0.0
    %632 = vmatprep.subr.mxu0 0.0
    %633 = vmatpush1.msra.mxu0 0.0
    %634 = vmatprep.subr.mxu0 0.0
    %635 = vmatpush1.msra.mxu0 0.0
    %636 = vmatprep.subr.mxu0 0.0
    %637 = vmatpush1.msra.mxu0 0.0
    %638 = vmatprep.subr.mxu0 0.0
    %639 = vmatpush1.msra.mxu0 0.0
    %640 = vmatprep.subr.mxu0 0.0
    %641 = vmatpush1.msra.mxu0 0.0
    %642 = vmatprep.subr.mxu0 0.0
    %643 = vmatpush1.msra.mxu0 0.0
    %644 = vmatprep.subr.mxu0 0.0
    %645 = vmatpush1.msra.mxu0 0.0
    %646 = vmatprep.subr.mxu0 0.0
    %647 = vmatpush1.msra.mxu0 0.0
    %648 = vmatprep.subr.mxu0 0.0
    %649 = vmatpush1.msra.mxu0 0.0
    %650 = vmatprep.subr.mxu0 0.0
    %651 = vmatpush1.msra.mxu0 0.0
    %652 = vmatprep.subr.mxu0 0.0
    %653 = vmatpush1.msra.mxu0 0.0
    %654 = vmatprep.subr.mxu0 0.0
    %655 = vmatpush1.msra.mxu0 0.0
    %656 = vmatprep.subr.mxu0 0.0
    %657 = vmatpush1.msra.mxu0 0.0
    %658 = vmatprep.subr.mxu0 0.0
    %659 = vmatpush1.msra.mxu0 0.0
    %660 = vmatprep.subr.mxu0 0.0
    %661 = vmatpush1.msra.mxu0 0.0
    %662 = vmatprep.subr.mxu0 0.0
    %663 = vmatpush1.msra.mxu0 0.0
    %664 = vmatprep.subr.mxu0 0.0
    %665 = vmatpush1.msra.mxu0 0.0
    %666 = vmatprep.subr.mxu0 0.0
    %667 = vmatpush1.msra.mxu0 0.0
    %668 = vmatprep.subr.mxu0 0.0
    %669 = vmatpush1.msra.mxu0 0.0
    %670 = vmatprep.subr.mxu0 0.0
    %671 = vmatpush1.msra.mxu0 0.0
    %672 = vmatprep.subr.mxu0 0.0
    %673 = vmatpush1.msra.mxu0 0.0
    %674 = vmatprep.subr.mxu0 0.0
    %675 = vmatpush1.msra.mxu0 0.0
    %676 = vmatprep.subr.mxu0 0.0
    %677 = vmatpush1.msra.mxu0 0.0
    %678 = vmatprep.subr.mxu0 0.0
    %679 = vmatpush1.msra.mxu0 0.0
    %680 = vmatprep.subr.mxu0 0.0
    %681 = vmatpush1.msra.mxu0 0.0
    %682 = vmatprep.subr.mxu0 0.0
    %683 = vmatpush1.msra.mxu0 0.0
    %684 = vmatprep.subr.mxu0 0.0
    %685 = vmatpush1.msra.mxu0 0.0
    %686 = vmatprep.subr.mxu0 0.0
    %687 = vmatpush1.msra.mxu0 0.0
    %688 = vmatprep.subr.mxu0 0.0
    %689 = vmatpush1.msra.mxu0 0.0
    %690 = vmatprep.mubr.f32.mxu0 0.0
    %691 = vmatmul.mubr.f32.gmra.mrb[0].mxu0 %v621
    %v692 = vpop.f32.mrb[0].mxu0
    %v693 = vadd.f32 0.0, %v692
    %v694 = vpop.f32.mrb[0].mxu0
    %v695 = vadd.f32 0.0, %v694
    %696 = vmatprep.mubr.f32.mxu0 0.0
    %697 = vmatmul.mubr.f32.gmra.mrb[0].mxu0 %v624
    %v698 = vpop.f32.mrb[0].mxu0
    %v699 = vadd.f32 0.0, %v698
    %v700 = vpop.f32.mrb[0].mxu0
    %v701 = vadd.f32 0.0, %v700
    %702 = vdwg.mxu0
    %703 = vmatprep.subr.mxu0 0.0
    %704 = vmatpush1.msra.mxu0 %v610
    %705 = vmatprep.subr.mxu0 0.0
    %706 = vmatpush1.msra.mxu0 %v615
    %707 = vmatprep.subr.mxu0 0.0
    %708 = vmatpush1.msra.mxu0 0.0
    %709 = vmatprep.subr.mxu0 0.0
    %710 = vmatpush1.msra.mxu0 0.0
    %711 = vmatprep.subr.mxu0 0.0
    %712 = vmatpush1.msra.mxu0 0.0
    %713 = vmatprep.subr.mxu0 0.0
    %714 = vmatpush1.msra.mxu0 0.0
    %715 = vmatprep.subr.mxu0 0.0
    %716 = vmatpush1.msra.mxu0 0.0
    %717 = vmatprep.subr.mxu0 0.0
    %718 = vmatpush1.msra.mxu0 0.0
    %719 = vmatprep.subr.mxu0 0.0
    %720 = vmatpush1.msra.mxu0 0.0
    %721 = vmatprep.subr.mxu0 0.0
    %722 = vmatpush1.msra.mxu0 0.0
    %723 = vmatprep.subr.mxu0 0.0
    %724 = vmatpush1.msra.mxu0 0.0
    %725 = vmatprep.subr.mxu0 0.0
    %726 = vmatpush1.msra.mxu0 0.0
    %727 = vmatprep.subr.mxu0 0.0
    %728 = vmatpush1.msra.mxu0 0.0
    %729 = vmatprep.subr.mxu0 0.0
    %730 = vmatpush1.msra.mxu0 0.0
    %731 = vmatprep.subr.mxu0 0.0
    %732 = vmatpush1.msra.mxu0 0.0
    %733 = vmatprep.subr.mxu0 0.0
    %734 = vmatpush1.msra.mxu0 0.0
    %735 = vmatprep.subr.mxu0 0.0
    %736 = vmatpush1.msra.mxu0 0.0
    %737 = vmatprep.subr.mxu0 0.0
    %738 = vmatpush1.msra.mxu0 0.0
    %739 = vmatprep.subr.mxu0 0.0
    %740 = vmatpush1.msra.mxu0 0.0
    %741 = vmatprep.subr.mxu0 0.0
    %742 = vmatpush1.msra.mxu0 0.0
    %743 = vmatprep.subr.mxu0 0.0
    %744 = vmatpush1.msra.mxu0 0.0
    %745 = vmatprep.subr.mxu0 0.0
    %746 = vmatpush1.msra.mxu0 0.0
    %747 = vmatprep.subr.mxu0 0.0
    %748 = vmatpush1.msra.mxu0 0.0
    %749 = vmatprep.subr.mxu0 0.0
    %750 = vmatpush1.msra.mxu0 0.0
    %751 = vmatprep.subr.mxu0 0.0
    %752 = vmatpush1.msra.mxu0 0.0
    %753 = vmatprep.subr.mxu0 0.0
    %754 = vmatpush1.msra.mxu0 0.0
    %755 = vmatprep.subr.mxu0 0.0
    %756 = vmatpush1.msra.mxu0 0.0
    %757 = vmatprep.subr.mxu0 0.0
    %758 = vmatpush1.msra.mxu0 0.0
    %759 = vmatprep.subr.mxu0 0.0
    %760 = vmatpush1.msra.mxu0 0.0
    %761 = vmatprep.subr.mxu0 0.0
    %762 = vmatpush1.msra.mxu0 0.0
    %763 = vmatprep.subr.mxu0 0.0
    %764 = vmatpush1.msra.mxu0 0.0
    %765 = vmatprep.subr.mxu0 0.0
    %766 = vmatpush1.msra.mxu0 0.0
    %767 = vmatprep.mubr.f32.mxu0 0.0
    %768 = vmatmul.mubr.f32.gmra.mrb[0].mxu0 %v621
    %v769 = vpop.f32.mrb[0].mxu0
    %v770 = vadd.f32 0.0, %v769
    %v771 = vpop.f32.mrb[0].mxu0
    %772 = vmatprep.mubr.f32.mxu0 0.0
    %773 = vmatmul.mubr.f32.gmra.mrb[0].mxu0 %v624
    %v774 = vpop.f32.mrb[0].mxu0
    %v775 = vadd.f32 0.0, %v774
    %v776 = vpop.f32.mrb[0].mxu0
    %777 = vdwg.mxu0
    %v778 = vmul.f32 %v533, %v693
    %v779 = vmul.f32 %v539, %v699
    %v780 = vmul.f32 %v535, %v695
    %v781 = vmul.f32 %v541, %v701
    %v782 = vadd.f32 %v778, %v780
    %v783 = vadd.f32 %v779, %v781
    %v784 = vmul.f32 %v610, %v770
    %v785 = vmul.f32 %v615, %v775
    %v786 = vadd.f32 %v782, %v784
    %v787 = vadd.f32 %v783, %v785
    %v788 = vmul.f32 %v693, %v693
    %v789 = vmul.f32 %v699, %v699
    %v790 = vmul.f32 %v695, %v695
    %v791 = vmul.f32 %v701, %v701
    %v792 = vadd.f32 %v788, %v790
    %v793 = vadd.f32 %v789, %v791
    %v794 = vmul.f32 %v770, %v770
    %v795 = vmul.f32 %v775, %v775
    %v796 = vadd.f32 %v792, %v794
    %v797 = vadd.f32 %v793, %v795
    %v798 = vadd.f32 %v796, 1e-06
    %v799 = vadd.f32 %v797, 1e-06
    %v800 = vrcp.pop %v798
    %v801 = vrcp.pop %v799
    %v802 = vmul.f32 %v786, %v800
    %v803 = vmul.f32 %v787, %v801
    %vm804 = vcmp.lt.f32.partialorder %v786, 0.0
    %vm805 = vcmp.lt.f32.partialorder %v787, 0.0
    %v806 = vsel %vm804, %v802, 0.0
    %v807 = vsel %vm805, %v803, 0.0
    %v808 = vmul.f32 %v806, 0.8
    %v809 = vmul.f32 %v807, 0.8
    %v810 = vmul.f32 %v808, %v693
    %v811 = vmul.f32 %v808, %v695
    %v812 = vmul.f32 %v808, %v770
    %v813 = vmul.f32 %v809, %v699
    %v814 = vmul.f32 %v809, %v701
    %v815 = vmul.f32 %v809, %v775
    %v816 = vsub.f32 %v533, %v810
    %v817 = vsub.f32 %v535, %v811
    %v818 = vsub.f32 %v610, %v812
    %v819 = vsub.f32 %v539, %v813
    %v820 = vsub.f32 %v541, %v814
    %v821 = vsub.f32 %v615, %v815
    %vm822 = vcmp.ge.f32.partialorder %v442, 0.0
    %vm823 = vcmp.ge.f32.partialorder %v447, 0.0
    %vm824 = vcmp.ge.f32.partialorder %v452, 0.0
    %vm825 = vcmp.ge.f32.partialorder %v457, 0.0
    %v826 = vmul.f32 %v442, 0.01
    %v827 = vmul.f32 %v447, 0.01
    %v828 = vmul.f32 %v452, 0.01
    %v829 = vmul.f32 %v457, 0.01
    %v830 = vsel %vm822, %v442, %v826
    %v831 = vsel %vm823, %v447, %v827
    %v832 = vsel %vm824, %v452, %v828
    %v833 = vsel %vm825, %v457, %v829
    %v834 = vld [vmem:[%s8] sm:$0xff]
    %v835 = vld [vmem:[%s8 + $0x8] sm:$0xff]
    %v836 = vld [vmem:[%s9] sm:$0xff]
    %v837 = vld [vmem:[%s9 + $0x8] sm:$0xff]
    %v838 = vld [vmem:[%s10] sm:$0xff]
    %v839 = vld [vmem:[%s10 + $0x8] sm:$0xff]
    %v840 = vld [vmem:[%s10 + $0x10] sm:$0xff]
    %v841 = vld [vmem:[%s10 + $0x18] sm:$0xff]
    %v842 = vld [vmem:[%s11] sm:$0xff]
    %v843 = vld [vmem:[%s11 + $0x8] sm:$0xff]
    %v844 = vld [vmem:[%s11 + $0x10] sm:$0xff]
    %v845 = vld [vmem:[%s11 + $0x18] sm:$0xff]
    %v847 = vsel %vm265, %v834, 0
    %v850 = vsel %vm265, %v835, 0
    %852 = vmatprep.subr.mxu0 %v817
    %853 = vmatpush1.msra.mxu0 %v816
    %854 = vmatprep.subr.mxu0 %v820
    %855 = vmatpush1.msra.mxu0 %v819
    %856 = vmatprep.subr.mxu0 0.0
    %857 = vmatpush1.msra.mxu0 0.0
    %858 = vmatprep.subr.mxu0 0.0
    %859 = vmatpush1.msra.mxu0 0.0
    %860 = vmatprep.subr.mxu0 0.0
    %861 = vmatpush1.msra.mxu0 0.0
    %862 = vmatprep.subr.mxu0 0.0
    %863 = vmatpush1.msra.mxu0 0.0
    %864 = vmatprep.subr.mxu0 0.0
    %865 = vmatpush1.msra.mxu0 0.0
    %866 = vmatprep.subr.mxu0 0.0
    %867 = vmatpush1.msra.mxu0 0.0
    %868 = vmatprep.subr.mxu0 0.0
    %869 = vmatpush1.msra.mxu0 0.0
    %870 = vmatprep.subr.mxu0 0.0
    %871 = vmatpush1.msra.mxu0 0.0
    %872 = vmatprep.subr.mxu0 0.0
    %873 = vmatpush1.msra.mxu0 0.0
    %874 = vmatprep.subr.mxu0 0.0
    %875 = vmatpush1.msra.mxu0 0.0
    %876 = vmatprep.subr.mxu0 0.0
    %877 = vmatpush1.msra.mxu0 0.0
    %878 = vmatprep.subr.mxu0 0.0
    %879 = vmatpush1.msra.mxu0 0.0
    %880 = vmatprep.subr.mxu0 0.0
    %881 = vmatpush1.msra.mxu0 0.0
    %882 = vmatprep.subr.mxu0 0.0
    %883 = vmatpush1.msra.mxu0 0.0
    %884 = vmatprep.subr.mxu0 0.0
    %885 = vmatpush1.msra.mxu0 0.0
    %886 = vmatprep.subr.mxu0 0.0
    %887 = vmatpush1.msra.mxu0 0.0
    %888 = vmatprep.subr.mxu0 0.0
    %889 = vmatpush1.msra.mxu0 0.0
    %890 = vmatprep.subr.mxu0 0.0
    %891 = vmatpush1.msra.mxu0 0.0
    %892 = vmatprep.subr.mxu0 0.0
    %893 = vmatpush1.msra.mxu0 0.0
    %894 = vmatprep.subr.mxu0 0.0
    %895 = vmatpush1.msra.mxu0 0.0
    %896 = vmatprep.subr.mxu0 0.0
    %897 = vmatpush1.msra.mxu0 0.0
    %898 = vmatprep.subr.mxu0 0.0
    %899 = vmatpush1.msra.mxu0 0.0
    %900 = vmatprep.subr.mxu0 0.0
    %901 = vmatpush1.msra.mxu0 0.0
    %902 = vmatprep.subr.mxu0 0.0
    %903 = vmatpush1.msra.mxu0 0.0
    %904 = vmatprep.subr.mxu0 0.0
    %905 = vmatpush1.msra.mxu0 0.0
    %906 = vmatprep.subr.mxu0 0.0
    %907 = vmatpush1.msra.mxu0 0.0
    %908 = vmatprep.subr.mxu0 0.0
    %909 = vmatpush1.msra.mxu0 0.0
    %910 = vmatprep.subr.mxu0 0.0
    %911 = vmatpush1.msra.mxu0 0.0
    %912 = vmatprep.subr.mxu0 0.0
    %913 = vmatpush1.msra.mxu0 0.0
    %914 = vmatprep.subr.mxu0 0.0
    %915 = vmatpush1.msra.mxu0 0.0
    %916 = vmatprep.mubr.f32.mxu0 0.0
    %917 = vmatmul.mubr.f32.gmra.mrb[0].mxu0 %v847
    %v918 = vpop.f32.mrb[0].mxu0
    %v919 = vadd.f32 0.0, %v918
    %v920 = vpop.f32.mrb[0].mxu0
    %v921 = vadd.f32 0.0, %v920
    %922 = vmatprep.mubr.f32.mxu0 0.0
    %923 = vmatmul.mubr.f32.gmra.mrb[0].mxu0 %v850
    %v924 = vpop.f32.mrb[0].mxu0
    %v925 = vadd.f32 0.0, %v924
    %v926 = vpop.f32.mrb[0].mxu0
    %v927 = vadd.f32 0.0, %v926
    %928 = vdwg.mxu0
    %929 = vmatprep.subr.mxu0 0.0
    %930 = vmatpush1.msra.mxu0 %v818
    %931 = vmatprep.subr.mxu0 0.0
    %932 = vmatpush1.msra.mxu0 %v821
    %933 = vmatprep.subr.mxu0 0.0
    %934 = vmatpush1.msra.mxu0 0.0
    %935 = vmatprep.subr.mxu0 0.0
    %936 = vmatpush1.msra.mxu0 0.0
    %937 = vmatprep.subr.mxu0 0.0
    %938 = vmatpush1.msra.mxu0 0.0
    %939 = vmatprep.subr.mxu0 0.0
    %940 = vmatpush1.msra.mxu0 0.0
    %941 = vmatprep.subr.mxu0 0.0
    %942 = vmatpush1.msra.mxu0 0.0
    %943 = vmatprep.subr.mxu0 0.0
    %944 = vmatpush1.msra.mxu0 0.0
    %945 = vmatprep.subr.mxu0 0.0
    %946 = vmatpush1.msra.mxu0 0.0
    %947 = vmatprep.subr.mxu0 0.0
    %948 = vmatpush1.msra.mxu0 0.0
    %949 = vmatprep.subr.mxu0 0.0
    %950 = vmatpush1.msra.mxu0 0.0
    %951 = vmatprep.subr.mxu0 0.0
    %952 = vmatpush1.msra.mxu0 0.0
    %953 = vmatprep.subr.mxu0 0.0
    %954 = vmatpush1.msra.mxu0 0.0
    %955 = vmatprep.subr.mxu0 0.0
    %956 = vmatpush1.msra.mxu0 0.0
    %957 = vmatprep.subr.mxu0 0.0
    %958 = vmatpush1.msra.mxu0 0.0
    %959 = vmatprep.subr.mxu0 0.0
    %960 = vmatpush1.msra.mxu0 0.0
    %961 = vmatprep.subr.mxu0 0.0
    %962 = vmatpush1.msra.mxu0 0.0
    %963 = vmatprep.subr.mxu0 0.0
    %964 = vmatpush1.msra.mxu0 0.0
    %965 = vmatprep.subr.mxu0 0.0
    %966 = vmatpush1.msra.mxu0 0.0
    %967 = vmatprep.subr.mxu0 0.0
    %968 = vmatpush1.msra.mxu0 0.0
    %969 = vmatprep.subr.mxu0 0.0
    %970 = vmatpush1.msra.mxu0 0.0
    %971 = vmatprep.subr.mxu0 0.0
    %972 = vmatpush1.msra.mxu0 0.0
    %973 = vmatprep.subr.mxu0 0.0
    %974 = vmatpush1.msra.mxu0 0.0
    %975 = vmatprep.subr.mxu0 0.0
    %976 = vmatpush1.msra.mxu0 0.0
    %977 = vmatprep.subr.mxu0 0.0
    %978 = vmatpush1.msra.mxu0 0.0
    %979 = vmatprep.subr.mxu0 0.0
    %980 = vmatpush1.msra.mxu0 0.0
    %981 = vmatprep.subr.mxu0 0.0
    %982 = vmatpush1.msra.mxu0 0.0
    %983 = vmatprep.subr.mxu0 0.0
    %984 = vmatpush1.msra.mxu0 0.0
    %985 = vmatprep.subr.mxu0 0.0
    %986 = vmatpush1.msra.mxu0 0.0
    %987 = vmatprep.subr.mxu0 0.0
    %988 = vmatpush1.msra.mxu0 0.0
    %989 = vmatprep.subr.mxu0 0.0
    %990 = vmatpush1.msra.mxu0 0.0
    %991 = vmatprep.subr.mxu0 0.0
    %992 = vmatpush1.msra.mxu0 0.0
    %993 = vmatprep.mubr.f32.mxu0 0.0
    %994 = vmatmul.mubr.f32.gmra.mrb[0].mxu0 %v847
    %v995 = vpop.f32.mrb[0].mxu0
    %v996 = vadd.f32 0.0, %v995
    %v997 = vpop.f32.mrb[0].mxu0
    %998 = vmatprep.mubr.f32.mxu0 0.0
    %999 = vmatmul.mubr.f32.gmra.mrb[0].mxu0 %v850
    %v1000 = vpop.f32.mrb[0].mxu0
    %v1001 = vadd.f32 0.0, %v1000
    %v1002 = vpop.f32.mrb[0].mxu0
    %1003 = vdwg.mxu0
    %v1004 = vmul.f32 %v919, %v919
    %v1005 = vmul.f32 %v925, %v925
    %v1006 = vmul.f32 %v921, %v921
    %v1007 = vmul.f32 %v927, %v927
    %v1008 = vadd.f32 %v1004, %v1006
    %v1009 = vadd.f32 %v1005, %v1007
    %v1010 = vmul.f32 %v996, %v996
    %v1011 = vmul.f32 %v1001, %v1001
    %v1012 = vadd.f32 %v1008, %v1010
    %v1013 = vadd.f32 %v1009, %v1011
    %v1014 = vrsqrt.pop %v1012
    %v1015 = vmul.f32 %v1012, %v1014
    %vm1016 = vcmp.eq.f32.partialorder %v1012, inf
    %v1017 = vsel %vm1016, %v1012, %v1015
    %vm1018 = vcmp.eq.f32.partialorder %v1012, 0.0
    %v1019 = vand.u32 %v1012, 2147483648
    %v1020 = vsel %vm1018, %v1019, %v1017
    %v1021 = vrsqrt.pop %v1013
    %v1022 = vmul.f32 %v1013, %v1021
    %vm1023 = vcmp.eq.f32.partialorder %v1013, inf
    %v1024 = vsel %vm1023, %v1013, %v1022
    %vm1025 = vcmp.eq.f32.partialorder %v1013, 0.0
    %v1026 = vand.u32 %v1013, 2147483648
    %v1027 = vsel %vm1025, %v1026, %v1024
    %vm1028 = vcmask 261120
    %v1030 = vsel %vm1028, %v842, 0
    %v1033 = vsel %vm1028, %v843, 0
    %v1036 = vsel %vm1028, %v844, 0
    %v1039 = vsel %vm1028, %v845, 0
    %1041 = vmatprep.subr.mxu0 0.0
    %1042 = vmatpush1.msra.mxu0 %v830
    %1043 = vmatprep.subr.mxu0 0.0
    %1044 = vmatpush1.msra.mxu0 %v831
    %1045 = vmatprep.subr.mxu0 0.0
    %1046 = vmatpush1.msra.mxu0 %v832
    %1047 = vmatprep.subr.mxu0 0.0
    %1048 = vmatpush1.msra.mxu0 %v833
    %1049 = vmatprep.subr.mxu0 0.0
    %1050 = vmatpush1.msra.mxu0 0.0
    %1051 = vmatprep.subr.mxu0 0.0
    %1052 = vmatpush1.msra.mxu0 0.0
    %1053 = vmatprep.subr.mxu0 0.0
    %1054 = vmatpush1.msra.mxu0 0.0
    %1055 = vmatprep.subr.mxu0 0.0
    %1056 = vmatpush1.msra.mxu0 0.0
    %1057 = vmatprep.subr.mxu0 0.0
    %1058 = vmatpush1.msra.mxu0 0.0
    %1059 = vmatprep.subr.mxu0 0.0
    %1060 = vmatpush1.msra.mxu0 0.0
    %1061 = vmatprep.subr.mxu0 0.0
    %1062 = vmatpush1.msra.mxu0 0.0
    %1063 = vmatprep.subr.mxu0 0.0
    %1064 = vmatpush1.msra.mxu0 0.0
    %1065 = vmatprep.subr.mxu0 0.0
    %1066 = vmatpush1.msra.mxu0 0.0
    %1067 = vmatprep.subr.mxu0 0.0
    %1068 = vmatpush1.msra.mxu0 0.0
    %1069 = vmatprep.subr.mxu0 0.0
    %1070 = vmatpush1.msra.mxu0 0.0
    %1071 = vmatprep.subr.mxu0 0.0
    %1072 = vmatpush1.msra.mxu0 0.0
    %1073 = vmatprep.subr.mxu0 0.0
    %1074 = vmatpush1.msra.mxu0 0.0
    %1075 = vmatprep.subr.mxu0 0.0
    %1076 = vmatpush1.msra.mxu0 0.0
    %1077 = vmatprep.subr.mxu0 0.0
    %1078 = vmatpush1.msra.mxu0 0.0
    %1079 = vmatprep.subr.mxu0 0.0
    %1080 = vmatpush1.msra.mxu0 0.0
    %1081 = vmatprep.subr.mxu0 0.0
    %1082 = vmatpush1.msra.mxu0 0.0
    %1083 = vmatprep.subr.mxu0 0.0
    %1084 = vmatpush1.msra.mxu0 0.0
    %1085 = vmatprep.subr.mxu0 0.0
    %1086 = vmatpush1.msra.mxu0 0.0
    %1087 = vmatprep.subr.mxu0 0.0
    %1088 = vmatpush1.msra.mxu0 0.0
    %1089 = vmatprep.subr.mxu0 0.0
    %1090 = vmatpush1.msra.mxu0 0.0
    %1091 = vmatprep.subr.mxu0 0.0
    %1092 = vmatpush1.msra.mxu0 0.0
    %1093 = vmatprep.subr.mxu0 0.0
    %1094 = vmatpush1.msra.mxu0 0.0
    %1095 = vmatprep.subr.mxu0 0.0
    %1096 = vmatpush1.msra.mxu0 0.0
    %1097 = vmatprep.subr.mxu0 0.0
    %1098 = vmatpush1.msra.mxu0 0.0
    %1099 = vmatprep.subr.mxu0 0.0
    %1100 = vmatpush1.msra.mxu0 0.0
    %1101 = vmatprep.subr.mxu0 0.0
    %1102 = vmatpush1.msra.mxu0 0.0
    %1103 = vmatprep.subr.mxu0 0.0
    %1104 = vmatpush1.msra.mxu0 0.0
    %1105 = vmatprep.mubr.f32.mxu0 0.0
    %1106 = vmatmul.mubr.f32.gmra.mrb[0].mxu0 %v1030
    %v1107 = vpop.f32.mrb[0].mxu0
    %v1108 = vadd.f32 0.0, %v1107
    %v1109 = vpop.f32.mrb[0].mxu0
    %1110 = vmatprep.mubr.f32.mxu0 0.0
    %1111 = vmatmul.mubr.f32.gmra.mrb[0].mxu0 %v1033
    %v1112 = vpop.f32.mrb[0].mxu0
    %v1113 = vadd.f32 0.0, %v1112
    %v1114 = vpop.f32.mrb[0].mxu0
    %1115 = vmatprep.mubr.f32.mxu0 0.0
    %1116 = vmatmul.mubr.f32.gmra.mrb[0].mxu0 %v1036
    %v1117 = vpop.f32.mrb[0].mxu0
    %v1118 = vadd.f32 0.0, %v1117
    %v1119 = vpop.f32.mrb[0].mxu0
    %1120 = vmatprep.mubr.f32.mxu0 0.0
    %1121 = vmatmul.mubr.f32.gmra.mrb[0].mxu0 %v1039
    %v1122 = vpop.f32.mrb[0].mxu0
    %v1123 = vadd.f32 0.0, %v1122
    %v1124 = vpop.f32.mrb[0].mxu0
    %1125 = vdwg.mxu0
    %v1127 = vsel %vm265, %v838, 0
    %v1130 = vsel %vm265, %v839, 0
    %v1133 = vsel %vm265, %v840, 0
    %v1136 = vsel %vm265, %v841, 0
    %1138 = vmatprep.subr.mxu0 0.0
    %1139 = vmatpush1.msra.mxu0 %v1020
    %1140 = vmatprep.subr.mxu0 0.0
    %1141 = vmatpush1.msra.mxu0 %v1027
    %1142 = vmatprep.subr.mxu0 0.0
    %1143 = vmatpush1.msra.mxu0 0.0
    %1144 = vmatprep.subr.mxu0 0.0
    %1145 = vmatpush1.msra.mxu0 0.0
    %1146 = vmatprep.subr.mxu0 0.0
    %1147 = vmatpush1.msra.mxu0 0.0
    %1148 = vmatprep.subr.mxu0 0.0
    %1149 = vmatpush1.msra.mxu0 0.0
    %1150 = vmatprep.subr.mxu0 0.0
    %1151 = vmatpush1.msra.mxu0 0.0
    %1152 = vmatprep.subr.mxu0 0.0
    %1153 = vmatpush1.msra.mxu0 0.0
    %1154 = vmatprep.subr.mxu0 0.0
    %1155 = vmatpush1.msra.mxu0 0.0
    %1156 = vmatprep.subr.mxu0 0.0
    %1157 = vmatpush1.msra.mxu0 0.0
    %1158 = vmatprep.subr.mxu0 0.0
    %1159 = vmatpush1.msra.mxu0 0.0
    %1160 = vmatprep.subr.mxu0 0.0
    %1161 = vmatpush1.msra.mxu0 0.0
    %1162 = vmatprep.subr.mxu0 0.0
    %1163 = vmatpush1.msra.mxu0 0.0
    %1164 = vmatprep.subr.mxu0 0.0
    %1165 = vmatpush1.msra.mxu0 0.0
    %1166 = vmatprep.subr.mxu0 0.0
    %1167 = vmatpush1.msra.mxu0 0.0
    %1168 = vmatprep.subr.mxu0 0.0
    %1169 = vmatpush1.msra.mxu0 0.0
    %1170 = vmatprep.subr.mxu0 0.0
    %1171 = vmatpush1.msra.mxu0 0.0
    %1172 = vmatprep.subr.mxu0 0.0
    %1173 = vmatpush1.msra.mxu0 0.0
    %1174 = vmatprep.subr.mxu0 0.0
    %1175 = vmatpush1.msra.mxu0 0.0
    %1176 = vmatprep.subr.mxu0 0.0
    %1177 = vmatpush1.msra.mxu0 0.0
    %1178 = vmatprep.subr.mxu0 0.0
    %1179 = vmatpush1.msra.mxu0 0.0
    %1180 = vmatprep.subr.mxu0 0.0
    %1181 = vmatpush1.msra.mxu0 0.0
    %1182 = vmatprep.subr.mxu0 0.0
    %1183 = vmatpush1.msra.mxu0 0.0
    %1184 = vmatprep.subr.mxu0 0.0
    %1185 = vmatpush1.msra.mxu0 0.0
    %1186 = vmatprep.subr.mxu0 0.0
    %1187 = vmatpush1.msra.mxu0 0.0
    %1188 = vmatprep.subr.mxu0 0.0
    %1189 = vmatpush1.msra.mxu0 0.0
    %1190 = vmatprep.subr.mxu0 0.0
    %1191 = vmatpush1.msra.mxu0 0.0
    %1192 = vmatprep.subr.mxu0 0.0
    %1193 = vmatpush1.msra.mxu0 0.0
    %1194 = vmatprep.subr.mxu0 0.0
    %1195 = vmatpush1.msra.mxu0 0.0
    %1196 = vmatprep.subr.mxu0 0.0
    %1197 = vmatpush1.msra.mxu0 0.0
    %1198 = vmatprep.subr.mxu0 0.0
    %1199 = vmatpush1.msra.mxu0 0.0
    %1200 = vmatprep.subr.mxu0 0.0
    %1201 = vmatpush1.msra.mxu0 0.0
    %1202 = vmatprep.mubr.f32.mxu0 0.0
    %1203 = vmatmul.mubr.f32.gmra.mrb[0].mxu0 %v1127
    %v1204 = vpop.f32.mrb[0].mxu0
    %v1205 = vadd.f32 %v1108, %v1204
    %v1206 = vpop.f32.mrb[0].mxu0
    %1207 = vmatprep.mubr.f32.mxu0 0.0
    %1208 = vmatmul.mubr.f32.gmra.mrb[0].mxu0 %v1130
    %v1209 = vpop.f32.mrb[0].mxu0
    %v1210 = vadd.f32 %v1113, %v1209
    %v1211 = vpop.f32.mrb[0].mxu0
    %1212 = vmatprep.mubr.f32.mxu0 0.0
    %1213 = vmatmul.mubr.f32.gmra.mrb[0].mxu0 %v1133
    %v1214 = vpop.f32.mrb[0].mxu0
    %v1215 = vadd.f32 %v1118, %v1214
    %v1216 = vpop.f32.mrb[0].mxu0
    %1217 = vmatprep.mubr.f32.mxu0 0.0
    %1218 = vmatmul.mubr.f32.gmra.mrb[0].mxu0 %v1136
    %v1219 = vpop.f32.mrb[0].mxu0
    %v1220 = vadd.f32 %v1123, %v1219
    %v1221 = vpop.f32.mrb[0].mxu0
    %1222 = vdwg.mxu0
    %v1224 = vsel %vm265, %v836, 0
    %v1227 = vsel %vm265, %v837, 0
    %1229 = vmatprep.subr.mxu0 %v921
    %1230 = vmatpush1.msra.mxu0 %v919
    %1231 = vmatprep.subr.mxu0 %v927
    %1232 = vmatpush1.msra.mxu0 %v925
    %1233 = vmatprep.subr.mxu0 0.0
    %1234 = vmatpush1.msra.mxu0 0.0
    %1235 = vmatprep.subr.mxu0 0.0
    %1236 = vmatpush1.msra.mxu0 0.0
    %1237 = vmatprep.subr.mxu0 0.0
    %1238 = vmatpush1.msra.mxu0 0.0
    %1239 = vmatprep.subr.mxu0 0.0
    %1240 = vmatpush1.msra.mxu0 0.0
    %1241 = vmatprep.subr.mxu0 0.0
    %1242 = vmatpush1.msra.mxu0 0.0
    %1243 = vmatprep.subr.mxu0 0.0
    %1244 = vmatpush1.msra.mxu0 0.0
    %1245 = vmatprep.subr.mxu0 0.0
    %1246 = vmatpush1.msra.mxu0 0.0
    %1247 = vmatprep.subr.mxu0 0.0
    %1248 = vmatpush1.msra.mxu0 0.0
    %1249 = vmatprep.subr.mxu0 0.0
    %1250 = vmatpush1.msra.mxu0 0.0
    %1251 = vmatprep.subr.mxu0 0.0
    %1252 = vmatpush1.msra.mxu0 0.0
    %1253 = vmatprep.subr.mxu0 0.0
    %1254 = vmatpush1.msra.mxu0 0.0
    %1255 = vmatprep.subr.mxu0 0.0
    %1256 = vmatpush1.msra.mxu0 0.0
    %1257 = vmatprep.subr.mxu0 0.0
    %1258 = vmatpush1.msra.mxu0 0.0
    %1259 = vmatprep.subr.mxu0 0.0
    %1260 = vmatpush1.msra.mxu0 0.0
    %1261 = vmatprep.subr.mxu0 0.0
    %1262 = vmatpush1.msra.mxu0 0.0
    %1263 = vmatprep.subr.mxu0 0.0
    %1264 = vmatpush1.msra.mxu0 0.0
    %1265 = vmatprep.subr.mxu0 0.0
    %1266 = vmatpush1.msra.mxu0 0.0
    %1267 = vmatprep.subr.mxu0 0.0
    %1268 = vmatpush1.msra.mxu0 0.0
    %1269 = vmatprep.subr.mxu0 0.0
    %1270 = vmatpush1.msra.mxu0 0.0
    %1271 = vmatprep.subr.mxu0 0.0
    %1272 = vmatpush1.msra.mxu0 0.0
    %1273 = vmatprep.subr.mxu0 0.0
    %1274 = vmatpush1.msra.mxu0 0.0
    %1275 = vmatprep.subr.mxu0 0.0
    %1276 = vmatpush1.msra.mxu0 0.0
    %1277 = vmatprep.subr.mxu0 0.0
    %1278 = vmatpush1.msra.mxu0 0.0
    %1279 = vmatprep.subr.mxu0 0.0
    %1280 = vmatpush1.msra.mxu0 0.0
    %1281 = vmatprep.subr.mxu0 0.0
    %1282 = vmatpush1.msra.mxu0 0.0
    %1283 = vmatprep.subr.mxu0 0.0
    %1284 = vmatpush1.msra.mxu0 0.0
    %1285 = vmatprep.subr.mxu0 0.0
    %1286 = vmatpush1.msra.mxu0 0.0
    %1287 = vmatprep.subr.mxu0 0.0
    %1288 = vmatpush1.msra.mxu0 0.0
    %1289 = vmatprep.subr.mxu0 0.0
    %1290 = vmatpush1.msra.mxu0 0.0
    %1291 = vmatprep.subr.mxu0 0.0
    %1292 = vmatpush1.msra.mxu0 0.0
    %1293 = vmatprep.mubr.f32.mxu0 0.0
    %1294 = vmatmul.mubr.f32.gmra.mrb[0].mxu0 %v1224
    %v1295 = vpop.f32.mrb[0].mxu0
    %v1296 = vadd.f32 0.0, %v1295
    %v1297 = vpop.f32.mrb[0].mxu0
    %v1298 = vadd.f32 0.0, %v1297
    %1299 = vmatprep.mubr.f32.mxu0 0.0
    %1300 = vmatmul.mubr.f32.gmra.mrb[0].mxu0 %v1227
    %v1301 = vpop.f32.mrb[0].mxu0
    %v1302 = vadd.f32 0.0, %v1301
    %v1303 = vpop.f32.mrb[0].mxu0
    %v1304 = vadd.f32 0.0, %v1303
    %1305 = vdwg.mxu0
    %1306 = vmatprep.subr.mxu0 0.0
    %1307 = vmatpush1.msra.mxu0 %v996
    %1308 = vmatprep.subr.mxu0 0.0
    %1309 = vmatpush1.msra.mxu0 %v1001
    %1310 = vmatprep.subr.mxu0 0.0
    %1311 = vmatpush1.msra.mxu0 0.0
    %1312 = vmatprep.subr.mxu0 0.0
    %1313 = vmatpush1.msra.mxu0 0.0
    %1314 = vmatprep.subr.mxu0 0.0
    %1315 = vmatpush1.msra.mxu0 0.0
    %1316 = vmatprep.subr.mxu0 0.0
    %1317 = vmatpush1.msra.mxu0 0.0
    %1318 = vmatprep.subr.mxu0 0.0
    %1319 = vmatpush1.msra.mxu0 0.0
    %1320 = vmatprep.subr.mxu0 0.0
    %1321 = vmatpush1.msra.mxu0 0.0
    %1322 = vmatprep.subr.mxu0 0.0
    %1323 = vmatpush1.msra.mxu0 0.0
    %1324 = vmatprep.subr.mxu0 0.0
    %1325 = vmatpush1.msra.mxu0 0.0
    %1326 = vmatprep.subr.mxu0 0.0
    %1327 = vmatpush1.msra.mxu0 0.0
    %1328 = vmatprep.subr.mxu0 0.0
    %1329 = vmatpush1.msra.mxu0 0.0
    %1330 = vmatprep.subr.mxu0 0.0
    %1331 = vmatpush1.msra.mxu0 0.0
    %1332 = vmatprep.subr.mxu0 0.0
    %1333 = vmatpush1.msra.mxu0 0.0
    %1334 = vmatprep.subr.mxu0 0.0
    %1335 = vmatpush1.msra.mxu0 0.0
    %1336 = vmatprep.subr.mxu0 0.0
    %1337 = vmatpush1.msra.mxu0 0.0
    %1338 = vmatprep.subr.mxu0 0.0
    %1339 = vmatpush1.msra.mxu0 0.0
    %1340 = vmatprep.subr.mxu0 0.0
    %1341 = vmatpush1.msra.mxu0 0.0
    %1342 = vmatprep.subr.mxu0 0.0
    %1343 = vmatpush1.msra.mxu0 0.0
    %1344 = vmatprep.subr.mxu0 0.0
    %1345 = vmatpush1.msra.mxu0 0.0
    %1346 = vmatprep.subr.mxu0 0.0
    %1347 = vmatpush1.msra.mxu0 0.0
    %1348 = vmatprep.subr.mxu0 0.0
    %1349 = vmatpush1.msra.mxu0 0.0
    %1350 = vmatprep.subr.mxu0 0.0
    %1351 = vmatpush1.msra.mxu0 0.0
    %1352 = vmatprep.subr.mxu0 0.0
    %1353 = vmatpush1.msra.mxu0 0.0
    %1354 = vmatprep.subr.mxu0 0.0
    %1355 = vmatpush1.msra.mxu0 0.0
    %1356 = vmatprep.subr.mxu0 0.0
    %1357 = vmatpush1.msra.mxu0 0.0
    %1358 = vmatprep.subr.mxu0 0.0
    %1359 = vmatpush1.msra.mxu0 0.0
    %1360 = vmatprep.subr.mxu0 0.0
    %1361 = vmatpush1.msra.mxu0 0.0
    %1362 = vmatprep.subr.mxu0 0.0
    %1363 = vmatpush1.msra.mxu0 0.0
    %1364 = vmatprep.subr.mxu0 0.0
    %1365 = vmatpush1.msra.mxu0 0.0
    %1366 = vmatprep.subr.mxu0 0.0
    %1367 = vmatpush1.msra.mxu0 0.0
    %1368 = vmatprep.subr.mxu0 0.0
    %1369 = vmatpush1.msra.mxu0 0.0
    %1370 = vmatprep.mubr.f32.mxu0 0.0
    %1371 = vmatmul.mubr.f32.gmra.mrb[0].mxu0 %v1224
    %v1372 = vpop.f32.mrb[0].mxu0
    %v1373 = vadd.f32 0.0, %v1372
    %v1374 = vpop.f32.mrb[0].mxu0
    %1375 = vmatprep.mubr.f32.mxu0 0.0
    %1376 = vmatmul.mubr.f32.gmra.mrb[0].mxu0 %v1227
    %v1377 = vpop.f32.mrb[0].mxu0
    %v1378 = vadd.f32 0.0, %v1377
    %v1379 = vpop.f32.mrb[0].mxu0
    %1380 = vdwg.mxu0
    %v1381 = vld [vmem:[%s12] sm:$0xff]
    %v1382 = vld [vmem:[%s12 + $0x8] sm:$0xff]
    %v1383 = vld [vmem:[%s12 + $0x10] sm:$0xff]
    %v1384 = vld [vmem:[%s12 + $0x18] sm:$0xff]
    %v1385 = vld [vmem:[%s12 + $0x20] sm:$0xff]
    %v1386 = vld [vmem:[%s12 + $0x28] sm:$0xff]
    %v1388 = vsel %vm265, %v1381, 0
    %v1391 = vsel %vm265, %v1382, 0
    %v1394 = vsel %vm265, %v1383, 0
    %v1397 = vsel %vm265, %v1384, 0
    %v1400 = vsel %vm265, %v1385, 0
    %v1403 = vsel %vm265, %v1386, 0
    %1405 = vmatprep.subr.mxu0 %v1298
    %1406 = vmatpush1.msra.mxu0 %v1296
    %1407 = vmatprep.subr.mxu0 %v1304
    %1408 = vmatpush1.msra.mxu0 %v1302
    %1409 = vmatprep.subr.mxu0 0.0
    %1410 = vmatpush1.msra.mxu0 0.0
    %1411 = vmatprep.subr.mxu0 0.0
    %1412 = vmatpush1.msra.mxu0 0.0
    %1413 = vmatprep.subr.mxu0 0.0
    %1414 = vmatpush1.msra.mxu0 0.0
    %1415 = vmatprep.subr.mxu0 0.0
    %1416 = vmatpush1.msra.mxu0 0.0
    %1417 = vmatprep.subr.mxu0 0.0
    %1418 = vmatpush1.msra.mxu0 0.0
    %1419 = vmatprep.subr.mxu0 0.0
    %1420 = vmatpush1.msra.mxu0 0.0
    %1421 = vmatprep.subr.mxu0 0.0
    %1422 = vmatpush1.msra.mxu0 0.0
    %1423 = vmatprep.subr.mxu0 0.0
    %1424 = vmatpush1.msra.mxu0 0.0
    %1425 = vmatprep.subr.mxu0 0.0
    %1426 = vmatpush1.msra.mxu0 0.0
    %1427 = vmatprep.subr.mxu0 0.0
    %1428 = vmatpush1.msra.mxu0 0.0
    %1429 = vmatprep.subr.mxu0 0.0
    %1430 = vmatpush1.msra.mxu0 0.0
    %1431 = vmatprep.subr.mxu0 0.0
    %1432 = vmatpush1.msra.mxu0 0.0
    %1433 = vmatprep.subr.mxu0 0.0
    %1434 = vmatpush1.msra.mxu0 0.0
    %1435 = vmatprep.subr.mxu0 0.0
    %1436 = vmatpush1.msra.mxu0 0.0
    %1437 = vmatprep.subr.mxu0 0.0
    %1438 = vmatpush1.msra.mxu0 0.0
    %1439 = vmatprep.subr.mxu0 0.0
    %1440 = vmatpush1.msra.mxu0 0.0
    %1441 = vmatprep.subr.mxu0 0.0
    %1442 = vmatpush1.msra.mxu0 0.0
    %1443 = vmatprep.subr.mxu0 0.0
    %1444 = vmatpush1.msra.mxu0 0.0
    %1445 = vmatprep.subr.mxu0 0.0
    %1446 = vmatpush1.msra.mxu0 0.0
    %1447 = vmatprep.subr.mxu0 0.0
    %1448 = vmatpush1.msra.mxu0 0.0
    %1449 = vmatprep.subr.mxu0 0.0
    %1450 = vmatpush1.msra.mxu0 0.0
    %1451 = vmatprep.subr.mxu0 0.0
    %1452 = vmatpush1.msra.mxu0 0.0
    %1453 = vmatprep.subr.mxu0 0.0
    %1454 = vmatpush1.msra.mxu0 0.0
    %1455 = vmatprep.subr.mxu0 0.0
    %1456 = vmatpush1.msra.mxu0 0.0
    %1457 = vmatprep.subr.mxu0 0.0
    %1458 = vmatpush1.msra.mxu0 0.0
    %1459 = vmatprep.subr.mxu0 0.0
    %1460 = vmatpush1.msra.mxu0 0.0
    %1461 = vmatprep.subr.mxu0 0.0
    %1462 = vmatpush1.msra.mxu0 0.0
    %1463 = vmatprep.subr.mxu0 0.0
    %1464 = vmatpush1.msra.mxu0 0.0
    %1465 = vmatprep.subr.mxu0 0.0
    %1466 = vmatpush1.msra.mxu0 0.0
    %1467 = vmatprep.subr.mxu0 0.0
    %1468 = vmatpush1.msra.mxu0 0.0
    %1469 = vmatprep.mubr.f32.mxu0 0.0
    %1470 = vmatmul.mubr.f32.gmra.mrb[0].mxu0 %v1388
    %v1471 = vpop.f32.mrb[0].mxu0
    %v1472 = vadd.f32 0.0, %v1471
    %v1473 = vpop.f32.mrb[0].mxu0
    %v1474 = vadd.f32 0.0, %v1473
    %1475 = vmatprep.mubr.f32.mxu0 0.0
    %1476 = vmatmul.mubr.f32.gmra.mrb[0].mxu0 %v1391
    %v1477 = vpop.f32.mrb[0].mxu0
    %v1478 = vadd.f32 0.0, %v1477
    %v1479 = vpop.f32.mrb[0].mxu0
    %v1480 = vadd.f32 0.0, %v1479
    %1481 = vmatprep.mubr.f32.mxu0 0.0
    %1482 = vmatmul.mubr.f32.gmra.mrb[0].mxu0 %v1394
    %v1483 = vpop.f32.mrb[0].mxu0
    %v1484 = vadd.f32 0.0, %v1483
    %v1485 = vpop.f32.mrb[0].mxu0
    %v1486 = vadd.f32 0.0, %v1485
    %1487 = vmatprep.mubr.f32.mxu0 0.0
    %1488 = vmatmul.mubr.f32.gmra.mrb[0].mxu0 %v1397
    %v1489 = vpop.f32.mrb[0].mxu0
    %v1490 = vadd.f32 0.0, %v1489
    %v1491 = vpop.f32.mrb[0].mxu0
    %v1492 = vadd.f32 0.0, %v1491
    %1493 = vmatprep.mubr.f32.mxu0 0.0
    %1494 = vmatmul.mubr.f32.gmra.mrb[0].mxu0 %v1400
    %v1495 = vpop.f32.mrb[0].mxu0
    %v1496 = vadd.f32 0.0, %v1495
    %v1497 = vpop.f32.mrb[0].mxu0
    %v1498 = vadd.f32 0.0, %v1497
    %1499 = vmatprep.mubr.f32.mxu0 0.0
    %1500 = vmatmul.mubr.f32.gmra.mrb[0].mxu0 %v1403
    %v1501 = vpop.f32.mrb[0].mxu0
    %v1502 = vadd.f32 0.0, %v1501
    %v1503 = vpop.f32.mrb[0].mxu0
    %v1504 = vadd.f32 0.0, %v1503
    %1505 = vdwg.mxu0
    %1506 = vmatprep.subr.mxu0 0.0
    %1507 = vmatpush1.msra.mxu0 %v1373
    %1508 = vmatprep.subr.mxu0 0.0
    %1509 = vmatpush1.msra.mxu0 %v1378
    %1510 = vmatprep.subr.mxu0 0.0
    %1511 = vmatpush1.msra.mxu0 0.0
    %1512 = vmatprep.subr.mxu0 0.0
    %1513 = vmatpush1.msra.mxu0 0.0
    %1514 = vmatprep.subr.mxu0 0.0
    %1515 = vmatpush1.msra.mxu0 0.0
    %1516 = vmatprep.subr.mxu0 0.0
    %1517 = vmatpush1.msra.mxu0 0.0
    %1518 = vmatprep.subr.mxu0 0.0
    %1519 = vmatpush1.msra.mxu0 0.0
    %1520 = vmatprep.subr.mxu0 0.0
    %1521 = vmatpush1.msra.mxu0 0.0
    %1522 = vmatprep.subr.mxu0 0.0
    %1523 = vmatpush1.msra.mxu0 0.0
    %1524 = vmatprep.subr.mxu0 0.0
    %1525 = vmatpush1.msra.mxu0 0.0
    %1526 = vmatprep.subr.mxu0 0.0
    %1527 = vmatpush1.msra.mxu0 0.0
    %1528 = vmatprep.subr.mxu0 0.0
    %1529 = vmatpush1.msra.mxu0 0.0
    %1530 = vmatprep.subr.mxu0 0.0
    %1531 = vmatpush1.msra.mxu0 0.0
    %1532 = vmatprep.subr.mxu0 0.0
    %1533 = vmatpush1.msra.mxu0 0.0
    %1534 = vmatprep.subr.mxu0 0.0
    %1535 = vmatpush1.msra.mxu0 0.0
    %1536 = vmatprep.subr.mxu0 0.0
    %1537 = vmatpush1.msra.mxu0 0.0
    %1538 = vmatprep.subr.mxu0 0.0
    %1539 = vmatpush1.msra.mxu0 0.0
    %1540 = vmatprep.subr.mxu0 0.0
    %1541 = vmatpush1.msra.mxu0 0.0
    %1542 = vmatprep.subr.mxu0 0.0
    %1543 = vmatpush1.msra.mxu0 0.0
    %1544 = vmatprep.subr.mxu0 0.0
    %1545 = vmatpush1.msra.mxu0 0.0
    %1546 = vmatprep.subr.mxu0 0.0
    %1547 = vmatpush1.msra.mxu0 0.0
    %1548 = vmatprep.subr.mxu0 0.0
    %1549 = vmatpush1.msra.mxu0 0.0
    %1550 = vmatprep.subr.mxu0 0.0
    %1551 = vmatpush1.msra.mxu0 0.0
    %1552 = vmatprep.subr.mxu0 0.0
    %1553 = vmatpush1.msra.mxu0 0.0
    %1554 = vmatprep.subr.mxu0 0.0
    %1555 = vmatpush1.msra.mxu0 0.0
    %1556 = vmatprep.subr.mxu0 0.0
    %1557 = vmatpush1.msra.mxu0 0.0
    %1558 = vmatprep.subr.mxu0 0.0
    %1559 = vmatpush1.msra.mxu0 0.0
    %1560 = vmatprep.subr.mxu0 0.0
    %1561 = vmatpush1.msra.mxu0 0.0
    %1562 = vmatprep.subr.mxu0 0.0
    %1563 = vmatpush1.msra.mxu0 0.0
    %1564 = vmatprep.subr.mxu0 0.0
    %1565 = vmatpush1.msra.mxu0 0.0
    %1566 = vmatprep.subr.mxu0 0.0
    %1567 = vmatpush1.msra.mxu0 0.0
    %1568 = vmatprep.subr.mxu0 0.0
    %1569 = vmatpush1.msra.mxu0 0.0
    %1570 = vmatprep.mubr.f32.mxu0 0.0
    %1571 = vmatmul.mubr.f32.gmra.mrb[0].mxu0 %v1388
    %v1572 = vpop.f32.mrb[0].mxu0
    %v1573 = vadd.f32 0.0, %v1572
    %v1574 = vpop.f32.mrb[0].mxu0
    %1575 = vmatprep.mubr.f32.mxu0 0.0
    %1576 = vmatmul.mubr.f32.gmra.mrb[0].mxu0 %v1391
    %v1577 = vpop.f32.mrb[0].mxu0
    %v1578 = vadd.f32 0.0, %v1577
    %v1579 = vpop.f32.mrb[0].mxu0
    %1580 = vmatprep.mubr.f32.mxu0 0.0
    %1581 = vmatmul.mubr.f32.gmra.mrb[0].mxu0 %v1394
    %v1582 = vpop.f32.mrb[0].mxu0
    %v1583 = vadd.f32 0.0, %v1582
    %v1584 = vpop.f32.mrb[0].mxu0
    %1585 = vmatprep.mubr.f32.mxu0 0.0
    %1586 = vmatmul.mubr.f32.gmra.mrb[0].mxu0 %v1397
    %v1587 = vpop.f32.mrb[0].mxu0
    %v1588 = vadd.f32 0.0, %v1587
    %v1589 = vpop.f32.mrb[0].mxu0
    %1590 = vmatprep.mubr.f32.mxu0 0.0
    %1591 = vmatmul.mubr.f32.gmra.mrb[0].mxu0 %v1400
    %v1592 = vpop.f32.mrb[0].mxu0
    %v1593 = vadd.f32 0.0, %v1592
    %v1594 = vpop.f32.mrb[0].mxu0
    %1595 = vmatprep.mubr.f32.mxu0 0.0
    %1596 = vmatmul.mubr.f32.gmra.mrb[0].mxu0 %v1403
    %v1597 = vpop.f32.mrb[0].mxu0
    %v1598 = vadd.f32 0.0, %v1597
    %v1599 = vpop.f32.mrb[0].mxu0
    %1600 = vdwg.mxu0
    %v1601 = vld [vmem:[%s13] sm:$0xf]
    %v1603 = vsel %vm265, %v1601, 0
    %1605 = vmatprep.subr.mxu0 %v1474
    %1606 = vmatpush1.msra.mxu0 %v1472
    %1607 = vmatprep.subr.mxu0 %v1480
    %1608 = vmatpush1.msra.mxu0 %v1478
    %1609 = vmatprep.subr.mxu0 0.0
    %1610 = vmatpush1.msra.mxu0 0.0
    %1611 = vmatprep.subr.mxu0 0.0
    %1612 = vmatpush1.msra.mxu0 0.0
    %1613 = vmatprep.subr.mxu0 0.0
    %1614 = vmatpush1.msra.mxu0 0.0
    %1615 = vmatprep.subr.mxu0 0.0
    %1616 = vmatpush1.msra.mxu0 0.0
    %1617 = vmatprep.subr.mxu0 0.0
    %1618 = vmatpush1.msra.mxu0 0.0
    %1619 = vmatprep.subr.mxu0 0.0
    %1620 = vmatpush1.msra.mxu0 0.0
    %1621 = vmatprep.subr.mxu0 0.0
    %1622 = vmatpush1.msra.mxu0 0.0
    %1623 = vmatprep.subr.mxu0 0.0
    %1624 = vmatpush1.msra.mxu0 0.0
    %1625 = vmatprep.subr.mxu0 0.0
    %1626 = vmatpush1.msra.mxu0 0.0
    %1627 = vmatprep.subr.mxu0 0.0
    %1628 = vmatpush1.msra.mxu0 0.0
    %1629 = vmatprep.subr.mxu0 0.0
    %1630 = vmatpush1.msra.mxu0 0.0
    %1631 = vmatprep.subr.mxu0 0.0
    %1632 = vmatpush1.msra.mxu0 0.0
    %1633 = vmatprep.subr.mxu0 0.0
    %1634 = vmatpush1.msra.mxu0 0.0
    %1635 = vmatprep.subr.mxu0 0.0
    %1636 = vmatpush1.msra.mxu0 0.0
    %1637 = vmatprep.subr.mxu0 0.0
    %1638 = vmatpush1.msra.mxu0 0.0
    %1639 = vmatprep.subr.mxu0 0.0
    %1640 = vmatpush1.msra.mxu0 0.0
    %1641 = vmatprep.subr.mxu0 0.0
    %1642 = vmatpush1.msra.mxu0 0.0
    %1643 = vmatprep.subr.mxu0 0.0
    %1644 = vmatpush1.msra.mxu0 0.0
    %1645 = vmatprep.subr.mxu0 0.0
    %1646 = vmatpush1.msra.mxu0 0.0
    %1647 = vmatprep.subr.mxu0 0.0
    %1648 = vmatpush1.msra.mxu0 0.0
    %1649 = vmatprep.subr.mxu0 0.0
    %1650 = vmatpush1.msra.mxu0 0.0
    %1651 = vmatprep.subr.mxu0 0.0
    %1652 = vmatpush1.msra.mxu0 0.0
    %1653 = vmatprep.subr.mxu0 0.0
    %1654 = vmatpush1.msra.mxu0 0.0
    %1655 = vmatprep.subr.mxu0 0.0
    %1656 = vmatpush1.msra.mxu0 0.0
    %1657 = vmatprep.subr.mxu0 0.0
    %1658 = vmatpush1.msra.mxu0 0.0
    %1659 = vmatprep.subr.mxu0 0.0
    %1660 = vmatpush1.msra.mxu0 0.0
    %1661 = vmatprep.subr.mxu0 0.0
    %1662 = vmatpush1.msra.mxu0 0.0
    %1663 = vmatprep.subr.mxu0 0.0
    %1664 = vmatpush1.msra.mxu0 0.0
    %1665 = vmatprep.subr.mxu0 0.0
    %1666 = vmatpush1.msra.mxu0 0.0
    %1667 = vmatprep.subr.mxu0 0.0
    %1668 = vmatpush1.msra.mxu0 0.0
    %1669 = vmatprep.mubr.f32.mxu0 0.0
    %1670 = vmatmul.mubr.f32.gmra.mrb[0].mxu0 %v1603
    %v1671 = vpop.f32.mrb[0].mxu0
    %v1672 = vadd.f32 0.0, %v1671
    %v1673 = vpop.f32.mrb[0].mxu0
    %v1674 = vadd.f32 0.0, %v1673
    %1675 = vdwg.mxu0
    %1676 = vmatprep.subr.mxu0 0.0
    %1677 = vmatpush1.msra.mxu0 %v1573
    %1678 = vmatprep.subr.mxu0 0.0
    %1679 = vmatpush1.msra.mxu0 %v1578
    %1680 = vmatprep.subr.mxu0 0.0
    %1681 = vmatpush1.msra.mxu0 0.0
    %1682 = vmatprep.subr.mxu0 0.0
    %1683 = vmatpush1.msra.mxu0 0.0
    %1684 = vmatprep.subr.mxu0 0.0
    %1685 = vmatpush1.msra.mxu0 0.0
    %1686 = vmatprep.subr.mxu0 0.0
    %1687 = vmatpush1.msra.mxu0 0.0
    %1688 = vmatprep.subr.mxu0 0.0
    %1689 = vmatpush1.msra.mxu0 0.0
    %1690 = vmatprep.subr.mxu0 0.0
    %1691 = vmatpush1.msra.mxu0 0.0
    %1692 = vmatprep.subr.mxu0 0.0
    %1693 = vmatpush1.msra.mxu0 0.0
    %1694 = vmatprep.subr.mxu0 0.0
    %1695 = vmatpush1.msra.mxu0 0.0
    %1696 = vmatprep.subr.mxu0 0.0
    %1697 = vmatpush1.msra.mxu0 0.0
    %1698 = vmatprep.subr.mxu0 0.0
    %1699 = vmatpush1.msra.mxu0 0.0
    %1700 = vmatprep.subr.mxu0 0.0
    %1701 = vmatpush1.msra.mxu0 0.0
    %1702 = vmatprep.subr.mxu0 0.0
    %1703 = vmatpush1.msra.mxu0 0.0
    %1704 = vmatprep.subr.mxu0 0.0
    %1705 = vmatpush1.msra.mxu0 0.0
    %1706 = vmatprep.subr.mxu0 0.0
    %1707 = vmatpush1.msra.mxu0 0.0
    %1708 = vmatprep.subr.mxu0 0.0
    %1709 = vmatpush1.msra.mxu0 0.0
    %1710 = vmatprep.subr.mxu0 0.0
    %1711 = vmatpush1.msra.mxu0 0.0
    %1712 = vmatprep.subr.mxu0 0.0
    %1713 = vmatpush1.msra.mxu0 0.0
    %1714 = vmatprep.subr.mxu0 0.0
    %1715 = vmatpush1.msra.mxu0 0.0
    %1716 = vmatprep.subr.mxu0 0.0
    %1717 = vmatpush1.msra.mxu0 0.0
    %1718 = vmatprep.subr.mxu0 0.0
    %1719 = vmatpush1.msra.mxu0 0.0
    %1720 = vmatprep.subr.mxu0 0.0
    %1721 = vmatpush1.msra.mxu0 0.0
    %1722 = vmatprep.subr.mxu0 0.0
    %1723 = vmatpush1.msra.mxu0 0.0
    %1724 = vmatprep.subr.mxu0 0.0
    %1725 = vmatpush1.msra.mxu0 0.0
    %1726 = vmatprep.subr.mxu0 0.0
    %1727 = vmatpush1.msra.mxu0 0.0
    %1728 = vmatprep.subr.mxu0 0.0
    %1729 = vmatpush1.msra.mxu0 0.0
    %1730 = vmatprep.subr.mxu0 0.0
    %1731 = vmatpush1.msra.mxu0 0.0
    %1732 = vmatprep.subr.mxu0 0.0
    %1733 = vmatpush1.msra.mxu0 0.0
    %1734 = vmatprep.subr.mxu0 0.0
    %1735 = vmatpush1.msra.mxu0 0.0
    %1736 = vmatprep.subr.mxu0 0.0
    %1737 = vmatpush1.msra.mxu0 0.0
    %1738 = vmatprep.subr.mxu0 0.0
    %1739 = vmatpush1.msra.mxu0 0.0
    %1740 = vmatprep.mubr.f32.mxu0 0.0
    %1741 = vmatmul.mubr.f32.gmra.mrb[0].mxu0 %v1603
    %v1742 = vpop.f32.mrb[0].mxu0
    %v1743 = vadd.f32 0.0, %v1742
    %v1744 = vpop.f32.mrb[0].mxu0
    %1745 = vdwg.mxu0
    %v1746 = vld [vmem:[%s14] sm:$0xf]
    %v1748 = vsel %vm265, %v1746, 0
    %1750 = vmatprep.subr.mxu0 %v1486
    %1751 = vmatpush1.msra.mxu0 %v1484
    %1752 = vmatprep.subr.mxu0 %v1492
    %1753 = vmatpush1.msra.mxu0 %v1490
    %1754 = vmatprep.subr.mxu0 0.0
    %1755 = vmatpush1.msra.mxu0 0.0
    %1756 = vmatprep.subr.mxu0 0.0
    %1757 = vmatpush1.msra.mxu0 0.0
    %1758 = vmatprep.subr.mxu0 0.0
    %1759 = vmatpush1.msra.mxu0 0.0
    %1760 = vmatprep.subr.mxu0 0.0
    %1761 = vmatpush1.msra.mxu0 0.0
    %1762 = vmatprep.subr.mxu0 0.0
    %1763 = vmatpush1.msra.mxu0 0.0
    %1764 = vmatprep.subr.mxu0 0.0
    %1765 = vmatpush1.msra.mxu0 0.0
    %1766 = vmatprep.subr.mxu0 0.0
    %1767 = vmatpush1.msra.mxu0 0.0
    %1768 = vmatprep.subr.mxu0 0.0
    %1769 = vmatpush1.msra.mxu0 0.0
    %1770 = vmatprep.subr.mxu0 0.0
    %1771 = vmatpush1.msra.mxu0 0.0
    %1772 = vmatprep.subr.mxu0 0.0
    %1773 = vmatpush1.msra.mxu0 0.0
    %1774 = vmatprep.subr.mxu0 0.0
    %1775 = vmatpush1.msra.mxu0 0.0
    %1776 = vmatprep.subr.mxu0 0.0
    %1777 = vmatpush1.msra.mxu0 0.0
    %1778 = vmatprep.subr.mxu0 0.0
    %1779 = vmatpush1.msra.mxu0 0.0
    %1780 = vmatprep.subr.mxu0 0.0
    %1781 = vmatpush1.msra.mxu0 0.0
    %1782 = vmatprep.subr.mxu0 0.0
    %1783 = vmatpush1.msra.mxu0 0.0
    %1784 = vmatprep.subr.mxu0 0.0
    %1785 = vmatpush1.msra.mxu0 0.0
    %1786 = vmatprep.subr.mxu0 0.0
    %1787 = vmatpush1.msra.mxu0 0.0
    %1788 = vmatprep.subr.mxu0 0.0
    %1789 = vmatpush1.msra.mxu0 0.0
    %1790 = vmatprep.subr.mxu0 0.0
    %1791 = vmatpush1.msra.mxu0 0.0
    %1792 = vmatprep.subr.mxu0 0.0
    %1793 = vmatpush1.msra.mxu0 0.0
    %1794 = vmatprep.subr.mxu0 0.0
    %1795 = vmatpush1.msra.mxu0 0.0
    %1796 = vmatprep.subr.mxu0 0.0
    %1797 = vmatpush1.msra.mxu0 0.0
    %1798 = vmatprep.subr.mxu0 0.0
    %1799 = vmatpush1.msra.mxu0 0.0
    %1800 = vmatprep.subr.mxu0 0.0
    %1801 = vmatpush1.msra.mxu0 0.0
    %1802 = vmatprep.subr.mxu0 0.0
    %1803 = vmatpush1.msra.mxu0 0.0
    %1804 = vmatprep.subr.mxu0 0.0
    %1805 = vmatpush1.msra.mxu0 0.0
    %1806 = vmatprep.subr.mxu0 0.0
    %1807 = vmatpush1.msra.mxu0 0.0
    %1808 = vmatprep.subr.mxu0 0.0
    %1809 = vmatpush1.msra.mxu0 0.0
    %1810 = vmatprep.subr.mxu0 0.0
    %1811 = vmatpush1.msra.mxu0 0.0
    %1812 = vmatprep.subr.mxu0 0.0
    %1813 = vmatpush1.msra.mxu0 0.0
    %1814 = vmatprep.mubr.f32.mxu0 0.0
    %1815 = vmatmul.mubr.f32.gmra.mrb[0].mxu0 %v1748
    %v1816 = vpop.f32.mrb[0].mxu0
    %v1817 = vadd.f32 0.0, %v1816
    %v1818 = vpop.f32.mrb[0].mxu0
    %v1819 = vadd.f32 0.0, %v1818
    %1820 = vdwg.mxu0
    %1821 = vmatprep.subr.mxu0 0.0
    %1822 = vmatpush1.msra.mxu0 %v1583
    %1823 = vmatprep.subr.mxu0 0.0
    %1824 = vmatpush1.msra.mxu0 %v1588
    %1825 = vmatprep.subr.mxu0 0.0
    %1826 = vmatpush1.msra.mxu0 0.0
    %1827 = vmatprep.subr.mxu0 0.0
    %1828 = vmatpush1.msra.mxu0 0.0
    %1829 = vmatprep.subr.mxu0 0.0
    %1830 = vmatpush1.msra.mxu0 0.0
    %1831 = vmatprep.subr.mxu0 0.0
    %1832 = vmatpush1.msra.mxu0 0.0
    %1833 = vmatprep.subr.mxu0 0.0
    %1834 = vmatpush1.msra.mxu0 0.0
    %1835 = vmatprep.subr.mxu0 0.0
    %1836 = vmatpush1.msra.mxu0 0.0
    %1837 = vmatprep.subr.mxu0 0.0
    %1838 = vmatpush1.msra.mxu0 0.0
    %1839 = vmatprep.subr.mxu0 0.0
    %1840 = vmatpush1.msra.mxu0 0.0
    %1841 = vmatprep.subr.mxu0 0.0
    %1842 = vmatpush1.msra.mxu0 0.0
    %1843 = vmatprep.subr.mxu0 0.0
    %1844 = vmatpush1.msra.mxu0 0.0
    %1845 = vmatprep.subr.mxu0 0.0
    %1846 = vmatpush1.msra.mxu0 0.0
    %1847 = vmatprep.subr.mxu0 0.0
    %1848 = vmatpush1.msra.mxu0 0.0
    %1849 = vmatprep.subr.mxu0 0.0
    %1850 = vmatpush1.msra.mxu0 0.0
    %1851 = vmatprep.subr.mxu0 0.0
    %1852 = vmatpush1.msra.mxu0 0.0
    %1853 = vmatprep.subr.mxu0 0.0
    %1854 = vmatpush1.msra.mxu0 0.0
    %1855 = vmatprep.subr.mxu0 0.0
    %1856 = vmatpush1.msra.mxu0 0.0
    %1857 = vmatprep.subr.mxu0 0.0
    %1858 = vmatpush1.msra.mxu0 0.0
    %1859 = vmatprep.subr.mxu0 0.0
    %1860 = vmatpush1.msra.mxu0 0.0
    %1861 = vmatprep.subr.mxu0 0.0
    %1862 = vmatpush1.msra.mxu0 0.0
    %1863 = vmatprep.subr.mxu0 0.0
    %1864 = vmatpush1.msra.mxu0 0.0
    %1865 = vmatprep.subr.mxu0 0.0
    %1866 = vmatpush1.msra.mxu0 0.0
    %1867 = vmatprep.subr.mxu0 0.0
    %1868 = vmatpush1.msra.mxu0 0.0
    %1869 = vmatprep.subr.mxu0 0.0
    %1870 = vmatpush1.msra.mxu0 0.0
    %1871 = vmatprep.subr.mxu0 0.0
    %1872 = vmatpush1.msra.mxu0 0.0
    %1873 = vmatprep.subr.mxu0 0.0
    %1874 = vmatpush1.msra.mxu0 0.0
    %1875 = vmatprep.subr.mxu0 0.0
    %1876 = vmatpush1.msra.mxu0 0.0
    %1877 = vmatprep.subr.mxu0 0.0
    %1878 = vmatpush1.msra.mxu0 0.0
    %1879 = vmatprep.subr.mxu0 0.0
    %1880 = vmatpush1.msra.mxu0 0.0
    %1881 = vmatprep.subr.mxu0 0.0
    %1882 = vmatpush1.msra.mxu0 0.0
    %1883 = vmatprep.subr.mxu0 0.0
    %1884 = vmatpush1.msra.mxu0 0.0
    %1885 = vmatprep.mubr.f32.mxu0 0.0
    %1886 = vmatmul.mubr.f32.gmra.mrb[0].mxu0 %v1748
    %v1887 = vpop.f32.mrb[0].mxu0
    %v1888 = vadd.f32 0.0, %v1887
    %v1889 = vpop.f32.mrb[0].mxu0
    %1890 = vdwg.mxu0
    %v1891 = vmul.f32 %v1817, 1.442695
    %v1892 = vpow.pop %v1891
    %v1893 = vmul.f32 %v1819, 1.442695
    %v1894 = vpow.pop %v1893
    %v1895 = vmul.f32 %v1888, 1.442695
    %v1896 = vpow.pop %v1895
    %v1897 = vmul.f32 %v1496, %v1496
    %v1898 = vmul.f32 %v1502, %v1502
    %v1899 = vmul.f32 %v1498, %v1498
    %v1900 = vmul.f32 %v1504, %v1504
    %v1901 = vadd.f32 %v1897, %v1899
    %v1902 = vadd.f32 %v1898, %v1900
    %v1903 = vmul.f32 %v1593, %v1593
    %v1904 = vmul.f32 %v1598, %v1598
    %v1905 = vadd.f32 %v1901, %v1903
    %v1906 = vadd.f32 %v1902, %v1904
    %v1907 = vrsqrt.pop %v1905
    %v1908 = vmul.f32 %v1905, %v1907
    %vm1909 = vcmp.eq.f32.partialorder %v1905, inf
    %v1910 = vsel %vm1909, %v1905, %v1908
    %vm1911 = vcmp.eq.f32.partialorder %v1905, 0.0
    %v1912 = vand.u32 %v1905, 2147483648
    %v1913 = vsel %vm1911, %v1912, %v1910
    %v1914 = vrsqrt.pop %v1906
    %v1915 = vmul.f32 %v1906, %v1914
    %vm1916 = vcmp.eq.f32.partialorder %v1906, inf
    %v1917 = vsel %vm1916, %v1906, %v1915
    %vm1918 = vcmp.eq.f32.partialorder %v1906, 0.0
    %v1919 = vand.u32 %v1906, 2147483648
    %v1920 = vsel %vm1918, %v1919, %v1917
    %v1921 = vld [vmem:[%s15] sm:$0xf]
    %v1922 = vld [vmem:[%s16] sm:$0xf]
    %v1924 = vsel %vm1028, %v1922, 0
    %1926 = vmatprep.subr.mxu0 0.0
    %1927 = vmatpush1.msra.mxu0 %v1205
    %1928 = vmatprep.subr.mxu0 0.0
    %1929 = vmatpush1.msra.mxu0 %v1210
    %1930 = vmatprep.subr.mxu0 0.0
    %1931 = vmatpush1.msra.mxu0 %v1215
    %1932 = vmatprep.subr.mxu0 0.0
    %1933 = vmatpush1.msra.mxu0 %v1220
    %1934 = vmatprep.subr.mxu0 0.0
    %1935 = vmatpush1.msra.mxu0 0.0
    %1936 = vmatprep.subr.mxu0 0.0
    %1937 = vmatpush1.msra.mxu0 0.0
    %1938 = vmatprep.subr.mxu0 0.0
    %1939 = vmatpush1.msra.mxu0 0.0
    %1940 = vmatprep.subr.mxu0 0.0
    %1941 = vmatpush1.msra.mxu0 0.0
    %1942 = vmatprep.subr.mxu0 0.0
    %1943 = vmatpush1.msra.mxu0 0.0
    %1944 = vmatprep.subr.mxu0 0.0
    %1945 = vmatpush1.msra.mxu0 0.0
    %1946 = vmatprep.subr.mxu0 0.0
    %1947 = vmatpush1.msra.mxu0 0.0
    %1948 = vmatprep.subr.mxu0 0.0
    %1949 = vmatpush1.msra.mxu0 0.0
    %1950 = vmatprep.subr.mxu0 0.0
    %1951 = vmatpush1.msra.mxu0 0.0
    %1952 = vmatprep.subr.mxu0 0.0
    %1953 = vmatpush1.msra.mxu0 0.0
    %1954 = vmatprep.subr.mxu0 0.0
    %1955 = vmatpush1.msra.mxu0 0.0
    %1956 = vmatprep.subr.mxu0 0.0
    %1957 = vmatpush1.msra.mxu0 0.0
    %1958 = vmatprep.subr.mxu0 0.0
    %1959 = vmatpush1.msra.mxu0 0.0
    %1960 = vmatprep.subr.mxu0 0.0
    %1961 = vmatpush1.msra.mxu0 0.0
    %1962 = vmatprep.subr.mxu0 0.0
    %1963 = vmatpush1.msra.mxu0 0.0
    %1964 = vmatprep.subr.mxu0 0.0
    %1965 = vmatpush1.msra.mxu0 0.0
    %1966 = vmatprep.subr.mxu0 0.0
    %1967 = vmatpush1.msra.mxu0 0.0
    %1968 = vmatprep.subr.mxu0 0.0
    %1969 = vmatpush1.msra.mxu0 0.0
    %1970 = vmatprep.subr.mxu0 0.0
    %1971 = vmatpush1.msra.mxu0 0.0
    %1972 = vmatprep.subr.mxu0 0.0
    %1973 = vmatpush1.msra.mxu0 0.0
    %1974 = vmatprep.subr.mxu0 0.0
    %1975 = vmatpush1.msra.mxu0 0.0
    %1976 = vmatprep.subr.mxu0 0.0
    %1977 = vmatpush1.msra.mxu0 0.0
    %1978 = vmatprep.subr.mxu0 0.0
    %1979 = vmatpush1.msra.mxu0 0.0
    %1980 = vmatprep.subr.mxu0 0.0
    %1981 = vmatpush1.msra.mxu0 0.0
    %1982 = vmatprep.subr.mxu0 0.0
    %1983 = vmatpush1.msra.mxu0 0.0
    %1984 = vmatprep.subr.mxu0 0.0
    %1985 = vmatpush1.msra.mxu0 0.0
    %1986 = vmatprep.subr.mxu0 0.0
    %1987 = vmatpush1.msra.mxu0 0.0
    %1988 = vmatprep.subr.mxu0 0.0
    %1989 = vmatpush1.msra.mxu0 0.0
    %1990 = vmatprep.mubr.f32.mxu0 0.0
    %1991 = vmatmul.mubr.f32.gmra.mrb[0].mxu0 %v1924
    %v1992 = vpop.f32.mrb[0].mxu0
    %v1993 = vadd.f32 0.0, %v1992
    %v1994 = vpop.f32.mrb[0].mxu0
    %1995 = vdwg.mxu0
    %v1997 = vsel %vm265, %v1921, 0
    %1999 = vmatprep.subr.mxu0 0.0
    %2000 = vmatpush1.msra.mxu0 %v1913
    %2001 = vmatprep.subr.mxu0 0.0
    %2002 = vmatpush1.msra.mxu0 %v1920
    %2003 = vmatprep.subr.mxu0 0.0
    %2004 = vmatpush1.msra.mxu0 0.0
    %2005 = vmatprep.subr.mxu0 0.0
    %2006 = vmatpush1.msra.mxu0 0.0
    %2007 = vmatprep.subr.mxu0 0.0
    %2008 = vmatpush1.msra.mxu0 0.0
    %2009 = vmatprep.subr.mxu0 0.0
    %2010 = vmatpush1.msra.mxu0 0.0
    %2011 = vmatprep.subr.mxu0 0.0
    %2012 = vmatpush1.msra.mxu0 0.0
    %2013 = vmatprep.subr.mxu0 0.0
    %2014 = vmatpush1.msra.mxu0 0.0
    %2015 = vmatprep.subr.mxu0 0.0
    %2016 = vmatpush1.msra.mxu0 0.0
    %2017 = vmatprep.subr.mxu0 0.0
    %2018 = vmatpush1.msra.mxu0 0.0
    %2019 = vmatprep.subr.mxu0 0.0
    %2020 = vmatpush1.msra.mxu0 0.0
    %2021 = vmatprep.subr.mxu0 0.0
    %2022 = vmatpush1.msra.mxu0 0.0
    %2023 = vmatprep.subr.mxu0 0.0
    %2024 = vmatpush1.msra.mxu0 0.0
    %2025 = vmatprep.subr.mxu0 0.0
    %2026 = vmatpush1.msra.mxu0 0.0
    %2027 = vmatprep.subr.mxu0 0.0
    %2028 = vmatpush1.msra.mxu0 0.0
    %2029 = vmatprep.subr.mxu0 0.0
    %2030 = vmatpush1.msra.mxu0 0.0
    %2031 = vmatprep.subr.mxu0 0.0
    %2032 = vmatpush1.msra.mxu0 0.0
    %2033 = vmatprep.subr.mxu0 0.0
    %2034 = vmatpush1.msra.mxu0 0.0
    %2035 = vmatprep.subr.mxu0 0.0
    %2036 = vmatpush1.msra.mxu0 0.0
    %2037 = vmatprep.subr.mxu0 0.0
    %2038 = vmatpush1.msra.mxu0 0.0
    %2039 = vmatprep.subr.mxu0 0.0
    %2040 = vmatpush1.msra.mxu0 0.0
    %2041 = vmatprep.subr.mxu0 0.0
    %2042 = vmatpush1.msra.mxu0 0.0
    %2043 = vmatprep.subr.mxu0 0.0
    %2044 = vmatpush1.msra.mxu0 0.0
    %2045 = vmatprep.subr.mxu0 0.0
    %2046 = vmatpush1.msra.mxu0 0.0
    %2047 = vmatprep.subr.mxu0 0.0
    %2048 = vmatpush1.msra.mxu0 0.0
    %2049 = vmatprep.subr.mxu0 0.0
    %2050 = vmatpush1.msra.mxu0 0.0
    %2051 = vmatprep.subr.mxu0 0.0
    %2052 = vmatpush1.msra.mxu0 0.0
    %2053 = vmatprep.subr.mxu0 0.0
    %2054 = vmatpush1.msra.mxu0 0.0
    %2055 = vmatprep.subr.mxu0 0.0
    %2056 = vmatpush1.msra.mxu0 0.0
    %2057 = vmatprep.subr.mxu0 0.0
    %2058 = vmatpush1.msra.mxu0 0.0
    %2059 = vmatprep.subr.mxu0 0.0
    %2060 = vmatpush1.msra.mxu0 0.0
    %2061 = vmatprep.subr.mxu0 0.0
    %2062 = vmatpush1.msra.mxu0 0.0
    %2063 = vmatprep.mubr.f32.mxu0 0.0
    %2064 = vmatmul.mubr.f32.gmra.mrb[0].mxu0 %v1997
    %v2065 = vpop.f32.mrb[0].mxu0
    %v2066 = vadd.f32 %v1993, %v2065
    %v2067 = vpop.f32.mrb[0].mxu0
    %2068 = vdwg.mxu0
    %vm2069 = vcmask 1043456
    %v2070 = vsel %vm2069, %v2066, -inf
    %v2071 = vrot.slane %v2070, 4
    %v2072 = vmax.f32 %v2070, %v2071
    %v2073 = vrot.slane %v2072, 2
    %v2074 = vmax.f32 %v2072, %v2073
    %v2075 = vrot.slane %v2074, 1
    %v2076 = vmax.f32 %v2074, %v2075
    %v2077 = vsub.f32 %v2066, %v2076
    %v2078 = vmul.f32 %v2077, 1.442695
    %v2079 = vpow.pop %v2078
    %v2080 = vsel %vm2069, %v2079, 0.0
    %v2081 = vrot.slane %v2080, 4
    %v2082 = vadd.f32 %v2080, %v2081
    %v2083 = vrot.slane %v2082, 2
    %v2084 = vadd.f32 %v2082, %v2083
    %v2085 = vrot.slane %v2084, 1
    %v2086 = vadd.f32 %v2084, %v2085
    %v2087 = vrcp.pop %v2086
    %v2088 = vmul.f32 %v2079, %v2087
    %2089 = vst [vmem:[#allocation7] sm:$0xf] %v2088
    %2090 = vst [vmem:[#allocation2] sm:$0xf] %v1672
    %v2091 = vld [vmem:[%s2] sm:$0x1]
    %v2093 = vlaneseq
    %v2094 = vshrl.u32 %v2093, 7
    %v2095 = vsub.s32 0, %v2094
    %v2096 = vrot.slane %v2091, %v2095
    %v2098 = vadd.f32 %v1672, %v2096
    %2099 = vst [vmem:[#allocation4] sm:$0xf] %v2098
    %2100 = vst [vmem:[#allocation6] sm:$0xf] %v1892
    %s2101 = scalar_lea.vmem [#allocation2], 4
    %2102 = vst [vmem:[%s2101] sm:$0xf] %v1674
    %s2103 = scalar_lea.vmem %s2, 1
    %v2104 = vld [vmem:[%s2103] sm:$0x1]
    %v2106 = vlaneseq
    %v2107 = vshrl.u32 %v2106, 7
    %v2108 = vsub.s32 0, %v2107
    %v2109 = vrot.slane %v2104, %v2108
    %v2111 = vadd.f32 %v1674, %v2109
    %s2112 = scalar_lea.vmem [#allocation4], 4
    %2113 = vst [vmem:[%s2112] sm:$0xf] %v2111
    %s2114 = scalar_lea.vmem [#allocation6], 4
    %2115 = vst [vmem:[%s2114] sm:$0xf] %v1894
    %s2116 = scalar_lea.vmem [#allocation2], 8
    %2117 = vst [vmem:[%s2116] sm:$0xf] %v1743
    %s2118 = scalar_lea.vmem %s2, 2
    %v2119 = vld [vmem:[%s2118] sm:$0x1]
    %v2121 = vlaneseq
    %v2122 = vshrl.u32 %v2121, 7
    %v2123 = vsub.s32 0, %v2122
    %v2124 = vrot.slane %v2119, %v2123
    %v2126 = vadd.f32 %v1743, %v2124
    %s2127 = scalar_lea.vmem [#allocation4], 8
    %2128 = vst [vmem:[%s2127] sm:$0xf] %v2126
    %s2129 = scalar_lea.vmem [#allocation6], 8
    %2130 = vst [vmem:[%s2129] sm:$0xf] %v1896
    // Predicated region
    $region70: #{tpu_custom_call.1} parent=1 // pred_check
      _
    $region71: #{tpu_custom_call.1} parent=1 // pred_check_branch
      %2132 = sbr.rel (0) target = $region73
    $region72: #{tpu_custom_call.1} parent=1 // pred_region
      %s2134 = ssub.s32 192, 192
      %2135 = vsyncadd [#allocation3], %s2134
      %s2136 = sshll.u32 [#allocation2], 4
      %s2137 = int_to_ptr.vmem [resolvable:$true] %s2136
      %2142 = dma.vmem_to_hbm [thread:$0]  %s2137, 192, %s17, [#allocation3], 64, 64, 4
    $region73: #{tpu_custom_call.1} parent=1 // pred_fallthru
      _
    // Predicated region
    $region74: #{tpu_custom_call.1} parent=1 // pred_check
      _
    $region75: #{tpu_custom_call.1} parent=1 // pred_check_branch
      %2144 = sbr.rel (0) target = $region77
    $region76: #{tpu_custom_call.1} parent=1 // pred_region
      %s2146 = ssub.s32 192, 192
      %2147 = vsyncadd [#allocation5], %s2146
      %s2148 = sshll.u32 [#allocation4], 4
      %s2149 = int_to_ptr.vmem [resolvable:$true] %s2148
      %2154 = dma.vmem_to_hbm [thread:$0]  %s2149, 192, %s18, [#allocation5], 64, 64, 4
    $region77: #{tpu_custom_call.1} parent=1 // pred_fallthru
      _
    // Predicated region
    $region78: #{tpu_custom_call.1} parent=1 // pred_check
      _
    $region79: #{tpu_custom_call.1} parent=1 // pred_check_branch
      %2156 = sbr.rel (0) target = $region81
    $region80: #{tpu_custom_call.1} parent=1 // pred_region
      %s2158 = ssub.s32 192, 192
      %2159 = vsyncadd [#allocation5], %s2158
      %s2160 = sshll.u32 [#allocation6], 4
      %s2161 = int_to_ptr.vmem [resolvable:$true] %s2160
      %2166 = dma.vmem_to_hbm [thread:$0]  %s2161, 192, %s19, [#allocation5], 64, 64, 4
    $region81: #{tpu_custom_call.1} parent=1 // pred_fallthru
      _
    // Predicated region
    $region82: #{tpu_custom_call.1} parent=1 // pred_check
      _
    $region83: #{tpu_custom_call.1} parent=1 // pred_check_branch
      %2168 = sbr.rel (0) target = $region85
    $region84: #{tpu_custom_call.1} parent=1 // pred_region
      %s2170 = ssub.s32 64, 64
      %2171 = vsyncadd [#allocation8], %s2170
      %s2173 = sshll.u32 [#allocation7], 4
      %s2174 = int_to_ptr.vmem [resolvable:$true] %s2173
      %2176 = dma.vmem_to_hbm [thread:$0]  %s2174, 64, %s20, [#allocation8]
    $region85: #{tpu_custom_call.1} parent=1 // pred_fallthru
      _
    // Predicated region
    $region86: #{tpu_custom_call.1} parent=1 // pred_check
      _
    $region87: #{tpu_custom_call.1} parent=1 // pred_check_branch
      %2178 = sbr.rel (0) target = $region89
    $region88: #{tpu_custom_call.1} parent=1 // pred_region
      %2179 = dma.done [#allocation3], 192
    $region89: #{tpu_custom_call.1} parent=1 // pred_fallthru
      _
    // Predicated region
    $region90: #{tpu_custom_call.1} parent=1 // pred_check
      _
    $region91: #{tpu_custom_call.1} parent=1 // pred_check_branch
      %2181 = sbr.rel (0) target = $region93
    $region92: #{tpu_custom_call.1} parent=1 // pred_region
      %2182 = dma.done [#allocation5], 192
    $region93: #{tpu_custom_call.1} parent=1 // pred_fallthru
      _
    // Predicated region
    $region94: #{tpu_custom_call.1} parent=1 // pred_check
      _
    $region95: #{tpu_custom_call.1} parent=1 // pred_check_branch
      %2184 = sbr.rel (0) target = $region97
    $region96: #{tpu_custom_call.1} parent=1 // pred_region
      %2185 = dma.done [#allocation5], 192
    $region97: #{tpu_custom_call.1} parent=1 // pred_fallthru
      _
    // Predicated region
    $region98: #{tpu_custom_call.1} parent=1 // pred_check
      _
    $region99: #{tpu_custom_call.1} parent=1 // pred_check_branch
      %2187 = sbr.rel (0) target = $region101
    $region100: #{tpu_custom_call.1} parent=1 // pred_region
      %2188 = dma.done [#allocation8], 64
    $region101: #{tpu_custom_call.1} parent=1 // pred_fallthru
      _
    %2189 = vsyncpa [#allocation3], 1
    %2190 = vsyncpa [#allocation5], 1
    %2191 = vsyncpa [#allocation8], 1

</llo_original>
